<compile_context>
chip_gen: v7x
topology: tpu7x:2x2x1
jax: 0.10.0
libtpu: 0.0.40
codegen_flags: <defaults>
</compile_context>

<pallas_src>
import math
import functools

import jax
import jax.numpy as jnp
from jax.experimental import pallas as pl
from jax.experimental.pallas import tpu as pltpu


# ----------------------------- math helpers ------------------------------------

def _layernorm(x, gamma, beta, eps):
    mu = jnp.mean(x, axis=-1, keepdims=True)
    var = jnp.mean((x - mu) ** 2, axis=-1, keepdims=True)
    return (x - mu) * jax.lax.rsqrt(var + eps) * gamma + beta


def _gelu_tanh(x):
    c = math.sqrt(2.0 / math.pi)
    return 0.5 * x * (1.0 + jnp.tanh(c * (x + 0.044715 * x * x * x)))


# ----------------------------- per-layer kernel body ----------------------------
# Grid axis 0 = layer index. Weights for layer l are streamed in (double-buffered
# by Pallas); the hidden state lives in out_ref (constant block index => resident
# across the whole "arbitrary" layer axis, written back to HBM once at the end).

def _encoder_kernel(batch, seq, hidden, num_heads, eps,
                    x_ref, wqkv_ref, bqkv_ref, wo_ref, wi_ref, bi_ref,
                    wo2_ref, vec_ref, out_ref):
    head = hidden // num_heads
    scale = 1.0 / math.sqrt(head)
    layer = pl.program_id(0)

    @pl.when(layer == 0)
    def _():
        out_ref[...] = x_ref[...]           # seed the resident hidden-state carry

    x = out_ref[...].astype(jnp.float32)    # (B*S, H)

    vec = vec_ref[0]                        # (6, H): bo, g1, b1, bo2, g2, b2
    bo, g1, b1 = vec[0:1], vec[1:2], vec[2:3]
    bo2, g2, b2 = vec[3:4], vec[4:5], vec[5:6]

    # --- self attention: per-head, lane-aligned weight blocks ------------------
    attn = jnp.zeros((batch * seq, hidden), jnp.float32)
    for h in range(num_heads):                       # static unroll (tiny)
        # wqkv_ref[0, 3h+j] is the full (H, head) column block prepared host-side
        # -> no sub-128-lane slicing of activations inside the kernel.
        qh = jnp.dot(x, wqkv_ref[0, 3 * h + 0],
                     preferred_element_type=jnp.float32) + bqkv_ref[0, 3 * h + 0]
        kh = jnp.dot(x, wqkv_ref[0, 3 * h + 1],
                     preferred_element_type=jnp.float32) + bqkv_ref[0, 3 * h + 1]
        vh = jnp.dot(x, wqkv_ref[0, 3 * h + 2],
                     preferred_element_type=jnp.float32) + bqkv_ref[0, 3 * h + 2]

        ctx_rows = []
        for b in range(batch):                       # static 8-row (sublane) slices
            lo = b * seq
            qb = qh[lo:lo + seq]                     # (S, head)
            kb = kh[lo:lo + seq]
            vb = vh[lo:lo + seq]
            s = jnp.dot(qb, kb.T, preferred_element_type=jnp.float32) * scale
            s = s - jnp.max(s, axis=-1, keepdims=True)
            p = jnp.exp(s)
            p = p / jnp.sum(p, axis=-1, keepdims=True)   # exact softmax denom
            ctx_rows.append(jnp.dot(p, vb, preferred_element_type=jnp.float32))
        ctx = jnp.concatenate(ctx_rows, axis=0)      # (B*S, head), 8-row aligned

        # fold the output projection per head (row block of Wo) -> no lane concat
        attn = attn + jnp.dot(ctx, wo_ref[0, h],
                              preferred_element_type=jnp.float32)

    # --- BertSelfOutput: dense bias + residual + LayerNorm ----------------------
    h1 = _layernorm(attn + bo + x, g1, b1, eps)

    # --- feed-forward: Intermediate (GELU) + Output + residual + LayerNorm ------
    inter = _gelu_tanh(jnp.dot(h1, wi_ref[0],
                               preferred_element_type=jnp.float32) + bi_ref[0])
    ffn = jnp.dot(inter, wo2_ref[0], preferred_element_type=jnp.float32) + bo2
    out_ref[...] = _layernorm(ffn + h1, g2, b2, eps).astype(out_ref.dtype)


# ----------------------------- wrapper ------------------------------------------

def _stack_encoder_params(all_layer_params, num_heads):
    """Pack per-layer params into stacked buffers with a leading layer axis.

    Per-head Q/K/V weight COLUMN blocks and Wo ROW blocks are split host-side so
    the kernel never slices a lane axis at non-128-aligned offsets.
    """
    wqkv, bqkv, wo, wi, bi, wo2, vec = [], [], [], [], [], [], []
    for (wq, bq, wk, bk, wv, bv, wo_, bo, g1, b1,
         wi_, bi_, wo2_, bo2, g2, b2) in all_layer_params:
        H = wq.shape[0]
        hd = H // num_heads
        w_blocks, b_blocks = [], []
        for h in range(num_heads):
            sl = slice(h * hd, (h + 1) * hd)
            w_blocks += [wq[:, sl], wk[:, sl], wv[:, sl]]   # each (H, hd)
            b_blocks += [bq[:, sl], bk[:, sl], bv[:, sl]]   # each (1, hd)
        wqkv.append(jnp.stack(w_blocks, axis=0))            # (3*nh, H, hd)
        bqkv.append(jnp.stack(b_blocks, axis=0))            # (3*nh, 1, hd)
        wo.append(wo_.reshape(num_heads, hd, H))            # per-head row blocks
        wi.append(wi_)                                      # (H, I)
        bi.append(bi_)                                      # (1, I)
        wo2.append(wo2_)                                    # (I, H)
        vec.append(jnp.concatenate([bo, g1, b1, bo2, g2, b2], axis=0))  # (6, H)
    stack = lambda xs: jnp.stack(xs, axis=0)
    return tuple(map(stack, (wqkv, bqkv, wo, wi, bi, wo2, vec)))


def model_encoder(hidden_states, all_layer_params, *, num_heads, eps):
    """ModelEncoder.forward (last_hidden_state) as one fused Pallas call."""
    B, S, H = hidden_states.shape
    L = len(all_layer_params)
    I = all_layer_params[0][10].shape[1]
    hd = H // num_heads
    BS = B * S

    packed = _stack_encoder_params(all_layer_params, num_heads)
    wqkv, bqkv, wo, wi, bi, wo2, vec = packed
    x2 = hidden_states.reshape(BS, H)       # whole token batch in one block

    kernel = functools.partial(_encoder_kernel, B, S, H, num_heads, eps)

    in_specs = [
        pl.BlockSpec((BS, H), lambda l: (0, 0)),                       # x (fetched once)
        pl.BlockSpec((1,) + wqkv.shape[1:], lambda l: (l, 0, 0, 0)),   # (3nh, H, hd)
        pl.BlockSpec((1,) + bqkv.shape[1:], lambda l: (l, 0, 0, 0)),   # (3nh, 1, hd)
        pl.BlockSpec((1,) + wo.shape[1:], lambda l: (l, 0, 0, 0)),     # (nh, hd, H)
        pl.BlockSpec((1,) + wi.shape[1:], lambda l: (l, 0, 0)),        # (H, I)
        pl.BlockSpec((1,) + bi.shape[1:], lambda l: (l, 0, 0)),        # (1, I)
        pl.BlockSpec((1,) + wo2.shape[1:], lambda l: (l, 0, 0)),       # (I, H)
        pl.BlockSpec((1,) + vec.shape[1:], lambda l: (l, 0, 0)),       # (6, H)
    ]

    # Advisory cost estimate for the XLA scheduler.
    flops_layer = (2 * BS * H * (3 * H)                 # q/k/v projections
                   + 2 * B * num_heads * S * S * hd * 2  # scores + context
                   + 2 * BS * H * H                      # attn output projection
                   + 2 * BS * H * I + 2 * BS * I * H)    # feed-forward
    transc_layer = B * num_heads * S * S + BS * I + 2 * BS
    bytes_accessed = 2 * x2.size * 4 + sum(int(p.size) * 4 for p in packed)
    cost = pl.CostEstimate(flops=L * flops_layer,
                           transcendentals=L * transc_layer,
                           bytes_accessed=bytes_accessed)

    out2 = pl.pallas_call(
        kernel,
        out_shape=jax.ShapeDtypeStruct((BS, H), hidden_states.dtype),
        grid_spec=pltpu.PrefetchScalarGridSpec(
            num_scalar_prefetch=0,
            grid=(L,),                                   # stream layers over the grid
            in_specs=in_specs,
            # constant block index -> output stays resident in VMEM across the
            # layer axis and doubles as the hidden-state carry (written to HBM once).
            out_specs=pl.BlockSpec((BS, H), lambda l: (0, 0)),
        ),
        compiler_params=pltpu.CompilerParams(
            dimension_semantics=("arbitrary",),          # layer axis carries state
            vmem_limit_bytes=32 * 1024 * 1024,
        ),
        cost_estimate=cost,
    )(x2, *packed)
    return out2.reshape(B, S, H)


# ----------------------------- pure-JAX reference --------------------------------

def _ref_layer(x, params, num_heads, eps):
    (wq, bq, wk, bk, wv, bv, wo, bo, g1, b1, wi, bi, wo2, bo2, g2, b2) = params
    B, S, H = x.shape
    hd = H // num_heads
    q = x @ wq + bq
    k = x @ wk + bk
    v = x @ wv + bv
    q = q.reshape(B, S, num_heads, hd).transpose(0, 2, 1, 3)
    k = k.reshape(B, S, num_heads, hd).transpose(0, 2, 1, 3)
    v = v.reshape(B, S, num_heads, hd).transpose(0, 2, 1, 3)
    scores = jnp.einsum("bhqd,bhkd->bhqk", q, k) / math.sqrt(hd)
    probs = jax.nn.softmax(scores, axis=-1)
    ctx = jnp.einsum("bhqk,bhkd->bhqd", probs, v)
    ctx = ctx.transpose(0, 2, 1, 3).reshape(B, S, H)
    attn_out = ctx @ wo + bo
    h1 = _layernorm(attn_out + x, g1, b1, eps)
    inter = _gelu_tanh(h1 @ wi + bi)
    ffn = inter @ wo2 + bo2
    return _layernorm(ffn + h1, g2, b2, eps)


def _ref_encoder(x, all_params, num_heads, eps):
    for p in all_params:
        x = _ref_layer(x, p, num_heads, eps)
    return x


# ----------------------------- parameter init ------------------------------------

def init_layer_params(key, hidden, intermediate):
    ks = jax.random.split(key, 6)
    std = 0.02
    f32 = jnp.float32

    def w(k, shape):
        return jax.random.normal(k, shape, dtype=f32) * std

    wq = w(ks[0], (hidden, hidden)); bq = jnp.zeros((1, hidden), f32)
    wk = w(ks[1], (hidden, hidden)); bk = jnp.zeros((1, hidden), f32)
    wv = w(ks[2], (hidden, hidden)); bv = jnp.zeros((1, hidden), f32)
    wo = w(ks[3], (hidden, hidden)); bo = jnp.zeros((1, hidden), f32)
    g1 = jnp.ones((1, hidden), f32); b1 = jnp.zeros((1, hidden), f32)
    wi = w(ks[4], (hidden, intermediate)); bi = jnp.zeros((1, intermediate), f32)
    wo2 = w(ks[5], (intermediate, hidden)); bo2 = jnp.zeros((1, hidden), f32)
    g2 = jnp.ones((1, hidden), f32); b2 = jnp.zeros((1, hidden), f32)
    return (wq, bq, wk, bk, wv, bv, wo, bo, g1, b1, wi, bi, wo2, bo2, g2, b2)


# ----------------------------- main -----------------------------------------------

if __name__ == "__main__":
    # synthetic config
    BATCH, SEQ, HIDDEN = 2, 8, 32
    NUM_HEADS = 2
    INTERMEDIATE = 64
    NUM_LAYERS = 2                 # layers_attention_type = ['self-attention'] * 2
    LN_EPS = 1e-12

    root = jax.random.PRNGKey(0)
    k_x, k_p = jax.random.split(root)
    hidden_states = jax.random.normal(k_x, (BATCH, SEQ, HIDDEN), dtype=jnp.float32)

    layer_keys = jax.random.split(k_p, NUM_LAYERS)
    all_params = [init_layer_params(k, HIDDEN, INTERMEDIATE) for k in layer_keys]

    out = model_encoder(hidden_states, all_params, num_heads=NUM_HEADS, eps=LN_EPS)
    out = jax.block_until_ready(out)

    ref = _ref_encoder(hidden_states, all_params, NUM_HEADS, LN_EPS)
    assert out.shape == (BATCH, SEQ, HIDDEN)
    # Exact softmax reciprocal now -> tight tolerance (only matmul-order rounding).
    assert jnp.allclose(out, ref, atol=2e-5, rtol=2e-5), (
        f"max abs err {jnp.max(jnp.abs(out - ref))}")

    print("KERNEL_OK")
</pallas_src>

<mosaic_0001>
module attributes {stable_mosaic.version = 11 : i64} {
  func.func @_encoder_kernel(%arg0: i32, %arg1: memref<16x32xf32, #tpu.memory_space<vmem>>, %arg2: memref<1x6x32x16xf32, #tpu.memory_space<vmem>>, %arg3: memref<1x6x1x16xf32, #tpu.memory_space<vmem>>, %arg4: memref<1x2x16x32xf32, #tpu.memory_space<vmem>>, %arg5: memref<1x32x64xf32, #tpu.memory_space<vmem>>, %arg6: memref<1x1x64xf32, #tpu.memory_space<vmem>>, %arg7: memref<1x64x32xf32, #tpu.memory_space<vmem>>, %arg8: memref<1x6x32xf32, #tpu.memory_space<vmem>>, %arg9: memref<16x32xf32, #tpu.memory_space<vmem>>) attributes {dimension_semantics = [#tpu.dimension_semantics<arbitrary>], iteration_bounds = array<i64: 2>, scalar_prefetch = 0 : i64, scratch_operands = 0 : i64, tpu.core_type = #tpu.core_type<tc>, window_params = [{pipeline_mode = #tpu.pipeline_mode<synchronous>, transform_indices = @transform_0, window_bounds = array<i64: 16, 32>}, {transform_indices = @transform_1, window_bounds = array<i64: 1, 6, 32, 16>}, {transform_indices = @transform_2, window_bounds = array<i64: 1, 6, 1, 16>}, {transform_indices = @transform_3, window_bounds = array<i64: 1, 2, 16, 32>}, {transform_indices = @transform_4, window_bounds = array<i64: 1, 32, 64>}, {transform_indices = @transform_5, window_bounds = array<i64: 1, 1, 64>}, {transform_indices = @transform_6, window_bounds = array<i64: 1, 64, 32>}, {transform_indices = @transform_7, window_bounds = array<i64: 1, 6, 32>}, {pipeline_mode = #tpu.pipeline_mode<synchronous>, transform_indices = @transform_8, window_bounds = array<i64: 16, 32>}]} {
    %c0_i32 = arith.constant 0 : i32
    %0 = arith.cmpi eq, %arg0, %c0_i32 : i32
    %1 = arith.extui %0 : i1 to i32
    %c0_i32_0 = arith.constant 0 : i32
    %2 = arith.cmpi ne, %1, %c0_i32_0 : i32
    scf.if %2 {
      %c0_111 = arith.constant 0 : index
      %c0_112 = arith.constant 0 : index
      %207 = vector.load %arg1[%c0_111, %c0_112] : memref<16x32xf32, #tpu.memory_space<vmem>>, vector<16x32xf32>
      %c0_113 = arith.constant 0 : index
      %c0_114 = arith.constant 0 : index
      %208 = vector.load %arg9[%c0_113, %c0_114] : memref<16x32xf32, #tpu.memory_space<vmem>>, vector<16x32xf32>
      tpu.vector_store %arg9[%c0_113, %c0_114], %207 {strides = array<i32>} : memref<16x32xf32, #tpu.memory_space<vmem>>, vector<16x32xf32>,
    } else {
    }
    %c0 = arith.constant 0 : index
    %c0_1 = arith.constant 0 : index
    %3 = vector.load %arg9[%c0, %c0_1] : memref<16x32xf32, #tpu.memory_space<vmem>>, vector<16x32xf32>
    %c0_2 = arith.constant 0 : index
    %c0_3 = arith.constant 0 : index
    %c0_4 = arith.constant 0 : index
    %4 = vector.load %arg8[%c0_2, %c0_3, %c0_4] : memref<1x6x32xf32, #tpu.memory_space<vmem>>, vector<1x6x32xf32>
    %5 = vector.shape_cast %4 : vector<1x6x32xf32> to vector<6x32xf32>
    %6 = vector.extract_strided_slice %5 {offsets = [0, 0], sizes = [1, 32], strides = [1, 1]} : vector<6x32xf32> to vector<1x32xf32>
    %7 = vector.extract_strided_slice %5 {offsets = [1, 0], sizes = [1, 32], strides = [1, 1]} : vector<6x32xf32> to vector<1x32xf32>
    %8 = vector.extract_strided_slice %5 {offsets = [2, 0], sizes = [1, 32], strides = [1, 1]} : vector<6x32xf32> to vector<1x32xf32>
    %9 = vector.extract_strided_slice %5 {offsets = [3, 0], sizes = [1, 32], strides = [1, 1]} : vector<6x32xf32> to vector<1x32xf32>
    %10 = vector.extract_strided_slice %5 {offsets = [4, 0], sizes = [1, 32], strides = [1, 1]} : vector<6x32xf32> to vector<1x32xf32>
    %11 = vector.extract_strided_slice %5 {offsets = [5, 0], sizes = [1, 32], strides = [1, 1]} : vector<6x32xf32> to vector<1x32xf32>
    %cst = arith.constant 0.000000e+00 : f32
    %12 = vector.broadcast %cst : f32 to vector<16x32xf32>
    %c0_5 = arith.constant 0 : index
    %c0_6 = arith.constant 0 : index
    %c0_7 = arith.constant 0 : index
    %c0_8 = arith.constant 0 : index
    %13 = vector.load %arg2[%c0_5, %c0_6, %c0_7, %c0_8] : memref<1x6x32x16xf32, #tpu.memory_space<vmem>>, vector<1x1x32x16xf32>
    %14 = vector.shape_cast %13 : vector<1x1x32x16xf32> to vector<32x16xf32>
    %cst_9 = arith.constant dense<0.000000e+00> : vector<16x16xf32>
    %15 = tpu.matmul %3, %14, %cst_9 {dimension_numbers = #tpu.dot_dimension_numbers<[1], [0], [0], [1], [0, 0, 1, 1], [], []>} : vector<16x32xf32>, vector<32x16xf32>, vector<16x16xf32> -> vector<16x16xf32>
    %c0_10 = arith.constant 0 : index
    %c0_11 = arith.constant 0 : index
    %c0_12 = arith.constant 0 : index
    %c0_13 = arith.constant 0 : index
    %16 = vector.load %arg3[%c0_10, %c0_11, %c0_12, %c0_13] : memref<1x6x1x16xf32, #tpu.memory_space<vmem>>, vector<1x1x1x16xf32>
    %17 = vector.shape_cast %16 : vector<1x1x1x16xf32> to vector<1x16xf32>
    %18 = vector.broadcast %17 : vector<1x16xf32> to vector<16x16xf32>
    %19 = arith.addf %15, %18 : vector<16x16xf32>
    %c0_14 = arith.constant 0 : index
    %c1 = arith.constant 1 : index
    %c0_15 = arith.constant 0 : index
    %c0_16 = arith.constant 0 : index
    %20 = vector.load %arg2[%c0_14, %c1, %c0_15, %c0_16] : memref<1x6x32x16xf32, #tpu.memory_space<vmem>>, vector<1x1x32x16xf32>
    %21 = vector.shape_cast %20 : vector<1x1x32x16xf32> to vector<32x16xf32>
    %cst_17 = arith.constant dense<0.000000e+00> : vector<16x16xf32>
    %22 = tpu.matmul %3, %21, %cst_17 {dimension_numbers = #tpu.dot_dimension_numbers<[1], [0], [0], [1], [0, 0, 1, 1], [], []>} : vector<16x32xf32>, vector<32x16xf32>, vector<16x16xf32> -> vector<16x16xf32>
    %c0_18 = arith.constant 0 : index
    %c1_19 = arith.constant 1 : index
    %c0_20 = arith.constant 0 : index
    %c0_21 = arith.constant 0 : index
    %23 = vector.load %arg3[%c0_18, %c1_19, %c0_20, %c0_21] : memref<1x6x1x16xf32, #tpu.memory_space<vmem>>, vector<1x1x1x16xf32>
    %24 = vector.shape_cast %23 : vector<1x1x1x16xf32> to vector<1x16xf32>
    %25 = vector.broadcast %24 : vector<1x16xf32> to vector<16x16xf32>
    %26 = arith.addf %22, %25 : vector<16x16xf32>
    %c0_22 = arith.constant 0 : index
    %c2 = arith.constant 2 : index
    %c0_23 = arith.constant 0 : index
    %c0_24 = arith.constant 0 : index
    %27 = vector.load %arg2[%c0_22, %c2, %c0_23, %c0_24] : memref<1x6x32x16xf32, #tpu.memory_space<vmem>>, vector<1x1x32x16xf32>
    %28 = vector.shape_cast %27 : vector<1x1x32x16xf32> to vector<32x16xf32>
    %cst_25 = arith.constant dense<0.000000e+00> : vector<16x16xf32>
    %29 = tpu.matmul %3, %28, %cst_25 {dimension_numbers = #tpu.dot_dimension_numbers<[1], [0], [0], [1], [0, 0, 1, 1], [], []>} : vector<16x32xf32>, vector<32x16xf32>, vector<16x16xf32> -> vector<16x16xf32>
    %c0_26 = arith.constant 0 : index
    %c2_27 = arith.constant 2 : index
    %c0_28 = arith.constant 0 : index
    %c0_29 = arith.constant 0 : index
    %30 = vector.load %arg3[%c0_26, %c2_27, %c0_28, %c0_29] : memref<1x6x1x16xf32, #tpu.memory_space<vmem>>, vector<1x1x1x16xf32>
    %31 = vector.shape_cast %30 : vector<1x1x1x16xf32> to vector<1x16xf32>
    %32 = vector.broadcast %31 : vector<1x16xf32> to vector<16x16xf32>
    %33 = arith.addf %29, %32 : vector<16x16xf32>
    %34 = vector.extract_strided_slice %19 {offsets = [0, 0], sizes = [8, 16], strides = [1, 1]} : vector<16x16xf32> to vector<8x16xf32>
    %35 = vector.extract_strided_slice %26 {offsets = [0, 0], sizes = [8, 16], strides = [1, 1]} : vector<16x16xf32> to vector<8x16xf32>
    %36 = vector.extract_strided_slice %33 {offsets = [0, 0], sizes = [8, 16], strides = [1, 1]} : vector<16x16xf32> to vector<8x16xf32>
    %37 = tpu.transpose %35, [1, 0] : vector<8x16xf32> -> vector<16x8xf32>
    %cst_30 = arith.constant dense<0.000000e+00> : vector<8x8xf32>
    %38 = tpu.matmul %34, %37, %cst_30 {dimension_numbers = #tpu.dot_dimension_numbers<[1], [0], [0], [1], [0, 0, 1, 1], [], []>} : vector<8x16xf32>, vector<16x8xf32>, vector<8x8xf32> -> vector<8x8xf32>
    %cst_31 = arith.constant 2.500000e-01 : f32
    %39 = vector.broadcast %cst_31 : f32 to vector<8x8xf32>
    %40 = arith.mulf %38, %39 : vector<8x8xf32>
    %cst_32 = arith.constant dense<0xFF800000> : vector<8xf32>
    %41 = vector.multi_reduction <maximumf>, %40, %cst_32 [1] : vector<8x8xf32> to vector<8xf32>
    %42 = vector.shape_cast %41 : vector<8xf32> to vector<8x1xf32>
    %43 = vector.broadcast %42 : vector<8x1xf32> to vector<8x8xf32>
    %44 = arith.subf %40, %43 : vector<8x8xf32>
    %45 = math.exp %44 : vector<8x8xf32>
    %cst_33 = arith.constant dense<0.000000e+00> : vector<8xf32>
    %46 = vector.multi_reduction <add>, %45, %cst_33 [1] : vector<8x8xf32> to vector<8xf32>
    %47 = vector.shape_cast %46 : vector<8xf32> to vector<8x1xf32>
    %48 = vector.broadcast %47 : vector<8x1xf32> to vector<8x8xf32>
    %49 = arith.divf %45, %48 : vector<8x8xf32>
    %cst_34 = arith.constant dense<0.000000e+00> : vector<8x16xf32>
    %50 = tpu.matmul %49, %36, %cst_34 {dimension_numbers = #tpu.dot_dimension_numbers<[1], [0], [0], [1], [0, 0, 1, 1], [], []>} : vector<8x8xf32>, vector<8x16xf32>, vector<8x16xf32> -> vector<8x16xf32>
    %51 = vector.extract_strided_slice %19 {offsets = [8, 0], sizes = [8, 16], strides = [1, 1]} : vector<16x16xf32> to vector<8x16xf32>
    %52 = vector.extract_strided_slice %26 {offsets = [8, 0], sizes = [8, 16], strides = [1, 1]} : vector<16x16xf32> to vector<8x16xf32>
    %53 = vector.extract_strided_slice %33 {offsets = [8, 0], sizes = [8, 16], strides = [1, 1]} : vector<16x16xf32> to vector<8x16xf32>
    %54 = tpu.transpose %52, [1, 0] : vector<8x16xf32> -> vector<16x8xf32>
    %cst_35 = arith.constant dense<0.000000e+00> : vector<8x8xf32>
    %55 = tpu.matmul %51, %54, %cst_35 {dimension_numbers = #tpu.dot_dimension_numbers<[1], [0], [0], [1], [0, 0, 1, 1], [], []>} : vector<8x16xf32>, vector<16x8xf32>, vector<8x8xf32> -> vector<8x8xf32>
    %cst_36 = arith.constant 2.500000e-01 : f32
    %56 = vector.broadcast %cst_36 : f32 to vector<8x8xf32>
    %57 = arith.mulf %55, %56 : vector<8x8xf32>
    %cst_37 = arith.constant dense<0xFF800000> : vector<8xf32>
    %58 = vector.multi_reduction <maximumf>, %57, %cst_37 [1] : vector<8x8xf32> to vector<8xf32>
    %59 = vector.shape_cast %58 : vector<8xf32> to vector<8x1xf32>
    %60 = vector.broadcast %59 : vector<8x1xf32> to vector<8x8xf32>
    %61 = arith.subf %57, %60 : vector<8x8xf32>
    %62 = math.exp %61 : vector<8x8xf32>
    %cst_38 = arith.constant dense<0.000000e+00> : vector<8xf32>
    %63 = vector.multi_reduction <add>, %62, %cst_38 [1] : vector<8x8xf32> to vector<8xf32>
    %64 = vector.shape_cast %63 : vector<8xf32> to vector<8x1xf32>
    %65 = vector.broadcast %64 : vector<8x1xf32> to vector<8x8xf32>
    %66 = arith.divf %62, %65 : vector<8x8xf32>
    %cst_39 = arith.constant dense<0.000000e+00> : vector<8x16xf32>
    %67 = tpu.matmul %66, %53, %cst_39 {dimension_numbers = #tpu.dot_dimension_numbers<[1], [0], [0], [1], [0, 0, 1, 1], [], []>} : vector<8x8xf32>, vector<8x16xf32>, vector<8x16xf32> -> vector<8x16xf32>
    %68 = tpu.concatenate %50, %67 in 0 : vector<8x16xf32>, vector<8x16xf32> -> vector<16x16xf32>
    %c0_40 = arith.constant 0 : index
    %c0_41 = arith.constant 0 : index
    %c0_42 = arith.constant 0 : index
    %c0_43 = arith.constant 0 : index
    %69 = vector.load %arg4[%c0_40, %c0_41, %c0_42, %c0_43] : memref<1x2x16x32xf32, #tpu.memory_space<vmem>>, vector<1x1x16x32xf32>
    %70 = vector.shape_cast %69 : vector<1x1x16x32xf32> to vector<16x32xf32>
    %cst_44 = arith.constant dense<0.000000e+00> : vector<16x32xf32>
    %71 = tpu.matmul %68, %70, %cst_44 {dimension_numbers = #tpu.dot_dimension_numbers<[1], [0], [0], [1], [0, 0, 1, 1], [], []>} : vector<16x16xf32>, vector<16x32xf32>, vector<16x32xf32> -> vector<16x32xf32>
    %72 = arith.addf %12, %71 : vector<16x32xf32>
    %c0_45 = arith.constant 0 : index
    %c3 = arith.constant 3 : index
    %c0_46 = arith.constant 0 : index
    %c0_47 = arith.constant 0 : index
    %73 = vector.load %arg2[%c0_45, %c3, %c0_46, %c0_47] : memref<1x6x32x16xf32, #tpu.memory_space<vmem>>, vector<1x1x32x16xf32>
    %74 = vector.shape_cast %73 : vector<1x1x32x16xf32> to vector<32x16xf32>
    %cst_48 = arith.constant dense<0.000000e+00> : vector<16x16xf32>
    %75 = tpu.matmul %3, %74, %cst_48 {dimension_numbers = #tpu.dot_dimension_numbers<[1], [0], [0], [1], [0, 0, 1, 1], [], []>} : vector<16x32xf32>, vector<32x16xf32>, vector<16x16xf32> -> vector<16x16xf32>
    %c0_49 = arith.constant 0 : index
    %c3_50 = arith.constant 3 : index
    %c0_51 = arith.constant 0 : index
    %c0_52 = arith.constant 0 : index
    %76 = vector.load %arg3[%c0_49, %c3_50, %c0_51, %c0_52] : memref<1x6x1x16xf32, #tpu.memory_space<vmem>>, vector<1x1x1x16xf32>
    %77 = vector.shape_cast %76 : vector<1x1x1x16xf32> to vector<1x16xf32>
    %78 = vector.broadcast %77 : vector<1x16xf32> to vector<16x16xf32>
    %79 = arith.addf %75, %78 : vector<16x16xf32>
    %c0_53 = arith.constant 0 : index
    %c4 = arith.constant 4 : index
    %c0_54 = arith.constant 0 : index
    %c0_55 = arith.constant 0 : index
    %80 = vector.load %arg2[%c0_53, %c4, %c0_54, %c0_55] : memref<1x6x32x16xf32, #tpu.memory_space<vmem>>, vector<1x1x32x16xf32>
    %81 = vector.shape_cast %80 : vector<1x1x32x16xf32> to vector<32x16xf32>
    %cst_56 = arith.constant dense<0.000000e+00> : vector<16x16xf32>
    %82 = tpu.matmul %3, %81, %cst_56 {dimension_numbers = #tpu.dot_dimension_numbers<[1], [0], [0], [1], [0, 0, 1, 1], [], []>} : vector<16x32xf32>, vector<32x16xf32>, vector<16x16xf32> -> vector<16x16xf32>
    %c0_57 = arith.constant 0 : index
    %c4_58 = arith.constant 4 : index
    %c0_59 = arith.constant 0 : index
    %c0_60 = arith.constant 0 : index
    %83 = vector.load %arg3[%c0_57, %c4_58, %c0_59, %c0_60] : memref<1x6x1x16xf32, #tpu.memory_space<vmem>>, vector<1x1x1x16xf32>
    %84 = vector.shape_cast %83 : vector<1x1x1x16xf32> to vector<1x16xf32>
    %85 = vector.broadcast %84 : vector<1x16xf32> to vector<16x16xf32>
    %86 = arith.addf %82, %85 : vector<16x16xf32>
    %c0_61 = arith.constant 0 : index
    %c5 = arith.constant 5 : index
    %c0_62 = arith.constant 0 : index
    %c0_63 = arith.constant 0 : index
    %87 = vector.load %arg2[%c0_61, %c5, %c0_62, %c0_63] : memref<1x6x32x16xf32, #tpu.memory_space<vmem>>, vector<1x1x32x16xf32>
    %88 = vector.shape_cast %87 : vector<1x1x32x16xf32> to vector<32x16xf32>
    %cst_64 = arith.constant dense<0.000000e+00> : vector<16x16xf32>
    %89 = tpu.matmul %3, %88, %cst_64 {dimension_numbers = #tpu.dot_dimension_numbers<[1], [0], [0], [1], [0, 0, 1, 1], [], []>} : vector<16x32xf32>, vector<32x16xf32>, vector<16x16xf32> -> vector<16x16xf32>
    %c0_65 = arith.constant 0 : index
    %c5_66 = arith.constant 5 : index
    %c0_67 = arith.constant 0 : index
    %c0_68 = arith.constant 0 : index
    %90 = vector.load %arg3[%c0_65, %c5_66, %c0_67, %c0_68] : memref<1x6x1x16xf32, #tpu.memory_space<vmem>>, vector<1x1x1x16xf32>
    %91 = vector.shape_cast %90 : vector<1x1x1x16xf32> to vector<1x16xf32>
    %92 = vector.broadcast %91 : vector<1x16xf32> to vector<16x16xf32>
    %93 = arith.addf %89, %92 : vector<16x16xf32>
    %94 = vector.extract_strided_slice %79 {offsets = [0, 0], sizes = [8, 16], strides = [1, 1]} : vector<16x16xf32> to vector<8x16xf32>
    %95 = vector.extract_strided_slice %86 {offsets = [0, 0], sizes = [8, 16], strides = [1, 1]} : vector<16x16xf32> to vector<8x16xf32>
    %96 = vector.extract_strided_slice %93 {offsets = [0, 0], sizes = [8, 16], strides = [1, 1]} : vector<16x16xf32> to vector<8x16xf32>
    %97 = tpu.transpose %95, [1, 0] : vector<8x16xf32> -> vector<16x8xf32>
    %cst_69 = arith.constant dense<0.000000e+00> : vector<8x8xf32>
    %98 = tpu.matmul %94, %97, %cst_69 {dimension_numbers = #tpu.dot_dimension_numbers<[1], [0], [0], [1], [0, 0, 1, 1], [], []>} : vector<8x16xf32>, vector<16x8xf32>, vector<8x8xf32> -> vector<8x8xf32>
    %cst_70 = arith.constant 2.500000e-01 : f32
    %99 = vector.broadcast %cst_70 : f32 to vector<8x8xf32>
    %100 = arith.mulf %98, %99 : vector<8x8xf32>
    %cst_71 = arith.constant dense<0xFF800000> : vector<8xf32>
    %101 = vector.multi_reduction <maximumf>, %100, %cst_71 [1] : vector<8x8xf32> to vector<8xf32>
    %102 = vector.shape_cast %101 : vector<8xf32> to vector<8x1xf32>
    %103 = vector.broadcast %102 : vector<8x1xf32> to vector<8x8xf32>
    %104 = arith.subf %100, %103 : vector<8x8xf32>
    %105 = math.exp %104 : vector<8x8xf32>
    %cst_72 = arith.constant dense<0.000000e+00> : vector<8xf32>
    %106 = vector.multi_reduction <add>, %105, %cst_72 [1] : vector<8x8xf32> to vector<8xf32>
    %107 = vector.shape_cast %106 : vector<8xf32> to vector<8x1xf32>
    %108 = vector.broadcast %107 : vector<8x1xf32> to vector<8x8xf32>
    %109 = arith.divf %105, %108 : vector<8x8xf32>
    %cst_73 = arith.constant dense<0.000000e+00> : vector<8x16xf32>
    %110 = tpu.matmul %109, %96, %cst_73 {dimension_numbers = #tpu.dot_dimension_numbers<[1], [0], [0], [1], [0, 0, 1, 1], [], []>} : vector<8x8xf32>, vector<8x16xf32>, vector<8x16xf32> -> vector<8x16xf32>
    %111 = vector.extract_strided_slice %79 {offsets = [8, 0], sizes = [8, 16], strides = [1, 1]} : vector<16x16xf32> to vector<8x16xf32>
    %112 = vector.extract_strided_slice %86 {offsets = [8, 0], sizes = [8, 16], strides = [1, 1]} : vector<16x16xf32> to vector<8x16xf32>
    %113 = vector.extract_strided_slice %93 {offsets = [8, 0], sizes = [8, 16], strides = [1, 1]} : vector<16x16xf32> to vector<8x16xf32>
    %114 = tpu.transpose %112, [1, 0] : vector<8x16xf32> -> vector<16x8xf32>
    %cst_74 = arith.constant dense<0.000000e+00> : vector<8x8xf32>
    %115 = tpu.matmul %111, %114, %cst_74 {dimension_numbers = #tpu.dot_dimension_numbers<[1], [0], [0], [1], [0, 0, 1, 1], [], []>} : vector<8x16xf32>, vector<16x8xf32>, vector<8x8xf32> -> vector<8x8xf32>
    %cst_75 = arith.constant 2.500000e-01 : f32
    %116 = vector.broadcast %cst_75 : f32 to vector<8x8xf32>
    %117 = arith.mulf %115, %116 : vector<8x8xf32>
    %cst_76 = arith.constant dense<0xFF800000> : vector<8xf32>
    %118 = vector.multi_reduction <maximumf>, %117, %cst_76 [1] : vector<8x8xf32> to vector<8xf32>
    %119 = vector.shape_cast %118 : vector<8xf32> to vector<8x1xf32>
    %120 = vector.broadcast %119 : vector<8x1xf32> to vector<8x8xf32>
    %121 = arith.subf %117, %120 : vector<8x8xf32>
    %122 = math.exp %121 : vector<8x8xf32>
    %cst_77 = arith.constant dense<0.000000e+00> : vector<8xf32>
    %123 = vector.multi_reduction <add>, %122, %cst_77 [1] : vector<8x8xf32> to vector<8xf32>
    %124 = vector.shape_cast %123 : vector<8xf32> to vector<8x1xf32>
    %125 = vector.broadcast %124 : vector<8x1xf32> to vector<8x8xf32>
    %126 = arith.divf %122, %125 : vector<8x8xf32>
    %cst_78 = arith.constant dense<0.000000e+00> : vector<8x16xf32>
    %127 = tpu.matmul %126, %113, %cst_78 {dimension_numbers = #tpu.dot_dimension_numbers<[1], [0], [0], [1], [0, 0, 1, 1], [], []>} : vector<8x8xf32>, vector<8x16xf32>, vector<8x16xf32> -> vector<8x16xf32>
    %128 = tpu.concatenate %110, %127 in 0 : vector<8x16xf32>, vector<8x16xf32> -> vector<16x16xf32>
    %c0_79 = arith.constant 0 : index
    %c1_80 = arith.constant 1 : index
    %c0_81 = arith.constant 0 : index
    %c0_82 = arith.constant 0 : index
    %129 = vector.load %arg4[%c0_79, %c1_80, %c0_81, %c0_82] : memref<1x2x16x32xf32, #tpu.memory_space<vmem>>, vector<1x1x16x32xf32>
    %130 = vector.shape_cast %129 : vector<1x1x16x32xf32> to vector<16x32xf32>
    %cst_83 = arith.constant dense<0.000000e+00> : vector<16x32xf32>
    %131 = tpu.matmul %128, %130, %cst_83 {dimension_numbers = #tpu.dot_dimension_numbers<[1], [0], [0], [1], [0, 0, 1, 1], [], []>} : vector<16x16xf32>, vector<16x32xf32>, vector<16x32xf32> -> vector<16x32xf32>
    %132 = arith.addf %72, %131 : vector<16x32xf32>
    %133 = vector.broadcast %6 : vector<1x32xf32> to vector<16x32xf32>
    %134 = arith.addf %132, %133 : vector<16x32xf32>
    %135 = arith.addf %134, %3 : vector<16x32xf32>
    %cst_84 = arith.constant dense<0.000000e+00> : vector<16xf32>
    %136 = vector.multi_reduction <add>, %135, %cst_84 [1] : vector<16x32xf32> to vector<16xf32>
    %137 = vector.shape_cast %136 : vector<16xf32> to vector<16x1xf32>
    %cst_85 = arith.constant 3.200000e+01 : f32
    %138 = vector.broadcast %cst_85 : f32 to vector<16x1xf32>
    %139 = arith.divf %137, %138 : vector<16x1xf32>
    %140 = vector.broadcast %139 : vector<16x1xf32> to vector<16x32xf32>
    %141 = arith.subf %135, %140 : vector<16x32xf32>
    %142 = arith.mulf %141, %141 : vector<16x32xf32>
    %cst_86 = arith.constant dense<0.000000e+00> : vector<16xf32>
    %143 = vector.multi_reduction <add>, %142, %cst_86 [1] : vector<16x32xf32> to vector<16xf32>
    %144 = vector.shape_cast %143 : vector<16xf32> to vector<16x1xf32>
    %cst_87 = arith.constant 3.200000e+01 : f32
    %145 = vector.broadcast %cst_87 : f32 to vector<16x1xf32>
    %146 = arith.divf %144, %145 : vector<16x1xf32>
    %147 = vector.broadcast %139 : vector<16x1xf32> to vector<16x32xf32>
    %148 = arith.subf %135, %147 : vector<16x32xf32>
    %cst_88 = arith.constant 9.99999996E-13 : f32
    %149 = vector.broadcast %cst_88 : f32 to vector<16x1xf32>
    %150 = arith.addf %146, %149 : vector<16x1xf32>
    %151 = math.rsqrt %150 : vector<16x1xf32>
    %152 = vector.broadcast %151 : vector<16x1xf32> to vector<16x32xf32>
    %153 = arith.mulf %148, %152 : vector<16x32xf32>
    %154 = vector.broadcast %7 : vector<1x32xf32> to vector<16x32xf32>
    %155 = arith.mulf %153, %154 : vector<16x32xf32>
    %156 = vector.broadcast %8 : vector<1x32xf32> to vector<16x32xf32>
    %157 = arith.addf %155, %156 : vector<16x32xf32>
    %c0_89 = arith.constant 0 : index
    %c0_90 = arith.constant 0 : index
    %c0_91 = arith.constant 0 : index
    %158 = vector.load %arg5[%c0_89, %c0_90, %c0_91] : memref<1x32x64xf32, #tpu.memory_space<vmem>>, vector<1x32x64xf32>
    %159 = vector.shape_cast %158 : vector<1x32x64xf32> to vector<32x64xf32>
    %cst_92 = arith.constant dense<0.000000e+00> : vector<16x64xf32>
    %160 = tpu.matmul %157, %159, %cst_92 {dimension_numbers = #tpu.dot_dimension_numbers<[1], [0], [0], [1], [0, 0, 1, 1], [], []>} : vector<16x32xf32>, vector<32x64xf32>, vector<16x64xf32> -> vector<16x64xf32>
    %c0_93 = arith.constant 0 : index
    %c0_94 = arith.constant 0 : index
    %c0_95 = arith.constant 0 : index
    %161 = vector.load %arg6[%c0_93, %c0_94, %c0_95] : memref<1x1x64xf32, #tpu.memory_space<vmem>>, vector<1x1x64xf32>
    %162 = vector.shape_cast %161 : vector<1x1x64xf32> to vector<1x64xf32>
    %163 = vector.broadcast %162 : vector<1x64xf32> to vector<16x64xf32>
    %164 = arith.addf %160, %163 : vector<16x64xf32>
    %cst_96 = arith.constant 5.000000e-01 : f32
    %165 = vector.broadcast %cst_96 : f32 to vector<16x64xf32>
    %166 = arith.mulf %165, %164 : vector<16x64xf32>
    %cst_97 = arith.constant 4.471500e-02 : f32
    %167 = vector.broadcast %cst_97 : f32 to vector<16x64xf32>
    %168 = arith.mulf %167, %164 : vector<16x64xf32>
    %169 = arith.mulf %168, %164 : vector<16x64xf32>
    %170 = arith.mulf %169, %164 : vector<16x64xf32>
    %171 = arith.addf %164, %170 : vector<16x64xf32>
    %cst_98 = arith.constant 0.797884583 : f32
    %172 = vector.broadcast %cst_98 : f32 to vector<16x64xf32>
    %173 = arith.mulf %172, %171 : vector<16x64xf32>
    %174 = math.tanh %173 : vector<16x64xf32>
    %cst_99 = arith.constant 1.000000e+00 : f32
    %175 = vector.broadcast %cst_99 : f32 to vector<16x64xf32>
    %176 = arith.addf %175, %174 : vector<16x64xf32>
    %177 = arith.mulf %166, %176 : vector<16x64xf32>
    %c0_100 = arith.constant 0 : index
    %c0_101 = arith.constant 0 : index
    %c0_102 = arith.constant 0 : index
    %178 = vector.load %arg7[%c0_100, %c0_101, %c0_102] : memref<1x64x32xf32, #tpu.memory_space<vmem>>, vector<1x64x32xf32>
    %179 = vector.shape_cast %178 : vector<1x64x32xf32> to vector<64x32xf32>
    %cst_103 = arith.constant dense<0.000000e+00> : vector<16x32xf32>
    %180 = tpu.matmul %177, %179, %cst_103 {dimension_numbers = #tpu.dot_dimension_numbers<[1], [0], [0], [1], [0, 0, 1, 1], [], []>} : vector<16x64xf32>, vector<64x32xf32>, vector<16x32xf32> -> vector<16x32xf32>
    %181 = vector.broadcast %9 : vector<1x32xf32> to vector<16x32xf32>
    %182 = arith.addf %180, %181 : vector<16x32xf32>
    %183 = arith.addf %182, %157 : vector<16x32xf32>
    %cst_104 = arith.constant dense<0.000000e+00> : vector<16xf32>
    %184 = vector.multi_reduction <add>, %183, %cst_104 [1] : vector<16x32xf32> to vector<16xf32>
    %185 = vector.shape_cast %184 : vector<16xf32> to vector<16x1xf32>
    %cst_105 = arith.constant 3.200000e+01 : f32
    %186 = vector.broadcast %cst_105 : f32 to vector<16x1xf32>
    %187 = arith.divf %185, %186 : vector<16x1xf32>
    %188 = vector.broadcast %187 : vector<16x1xf32> to vector<16x32xf32>
    %189 = arith.subf %183, %188 : vector<16x32xf32>
    %190 = arith.mulf %189, %189 : vector<16x32xf32>
    %cst_106 = arith.constant dense<0.000000e+00> : vector<16xf32>
    %191 = vector.multi_reduction <add>, %190, %cst_106 [1] : vector<16x32xf32> to vector<16xf32>
    %192 = vector.shape_cast %191 : vector<16xf32> to vector<16x1xf32>
    %cst_107 = arith.constant 3.200000e+01 : f32
    %193 = vector.broadcast %cst_107 : f32 to vector<16x1xf32>
    %194 = arith.divf %192, %193 : vector<16x1xf32>
    %195 = vector.broadcast %187 : vector<16x1xf32> to vector<16x32xf32>
    %196 = arith.subf %183, %195 : vector<16x32xf32>
    %cst_108 = arith.constant 9.99999996E-13 : f32
    %197 = vector.broadcast %cst_108 : f32 to vector<16x1xf32>
    %198 = arith.addf %194, %197 : vector<16x1xf32>
    %199 = math.rsqrt %198 : vector<16x1xf32>
    %200 = vector.broadcast %199 : vector<16x1xf32> to vector<16x32xf32>
    %201 = arith.mulf %196, %200 : vector<16x32xf32>
    %202 = vector.broadcast %10 : vector<1x32xf32> to vector<16x32xf32>
    %203 = arith.mulf %201, %202 : vector<16x32xf32>
    %204 = vector.broadcast %11 : vector<1x32xf32> to vector<16x32xf32>
    %205 = arith.addf %203, %204 : vector<16x32xf32>
    %c0_109 = arith.constant 0 : index
    %c0_110 = arith.constant 0 : index
    %206 = vector.load %arg9[%c0_109, %c0_110] : memref<16x32xf32, #tpu.memory_space<vmem>>, vector<16x32xf32>
    tpu.vector_store %arg9[%c0_109, %c0_110], %205 {strides = array<i32>} : memref<16x32xf32, #tpu.memory_space<vmem>>, vector<16x32xf32>,
    return
  }
  func.func @transform_0(%arg0: i32) -> (i32, i32) {
    %c0_i32 = arith.constant 0 : i32
    %c0_i32_0 = arith.constant 0 : i32
    %c0_i32_1 = arith.constant 0 : i32
    return %c0_i32, %c0_i32_0 : i32, i32
  }
  func.func @transform_1(%arg0: i32) -> (i32, i32, i32, i32) {
    %c0_i32 = arith.constant 0 : i32
    %c0_i32_0 = arith.constant 0 : i32
    %c0_i32_1 = arith.constant 0 : i32
    %c0_i32_2 = arith.constant 0 : i32
    return %arg0, %c0_i32, %c0_i32_0, %c0_i32_1 : i32, i32, i32, i32
  }
  func.func @transform_2(%arg0: i32) -> (i32, i32, i32, i32) {
    %c0_i32 = arith.constant 0 : i32
    %c0_i32_0 = arith.constant 0 : i32
    %c0_i32_1 = arith.constant 0 : i32
    %c0_i32_2 = arith.constant 0 : i32
    return %arg0, %c0_i32, %c0_i32_0, %c0_i32_1 : i32, i32, i32, i32
  }
  func.func @transform_3(%arg0: i32) -> (i32, i32, i32, i32) {
    %c0_i32 = arith.constant 0 : i32
    %c0_i32_0 = arith.constant 0 : i32
    %c0_i32_1 = arith.constant 0 : i32
    %c0_i32_2 = arith.constant 0 : i32
    return %arg0, %c0_i32, %c0_i32_0, %c0_i32_1 : i32, i32, i32, i32
  }
  func.func @transform_4(%arg0: i32) -> (i32, i32, i32) {
    %c0_i32 = arith.constant 0 : i32
    %c0_i32_0 = arith.constant 0 : i32
    %c0_i32_1 = arith.constant 0 : i32
    return %arg0, %c0_i32, %c0_i32_0 : i32, i32, i32
  }
  func.func @transform_5(%arg0: i32) -> (i32, i32, i32) {
    %c0_i32 = arith.constant 0 : i32
    %c0_i32_0 = arith.constant 0 : i32
    %c0_i32_1 = arith.constant 0 : i32
    return %arg0, %c0_i32, %c0_i32_0 : i32, i32, i32
  }
  func.func @transform_6(%arg0: i32) -> (i32, i32, i32) {
    %c0_i32 = arith.constant 0 : i32
    %c0_i32_0 = arith.constant 0 : i32
    %c0_i32_1 = arith.constant 0 : i32
    return %arg0, %c0_i32, %c0_i32_0 : i32, i32, i32
  }
  func.func @transform_7(%arg0: i32) -> (i32, i32, i32) {
    %c0_i32 = arith.constant 0 : i32
    %c0_i32_0 = arith.constant 0 : i32
    %c0_i32_1 = arith.constant 0 : i32
    return %arg0, %c0_i32, %c0_i32_0 : i32, i32, i32
  }
  func.func @transform_8(%arg0: i32) -> (i32, i32) {
    %c0_i32 = arith.constant 0 : i32
    %c0_i32_0 = arith.constant 0 : i32
    %c0_i32_1 = arith.constant 0 : i32
    return %c0_i32, %c0_i32_0 : i32, i32
  }
}

</mosaic_0001>

<llo_original>
// kernel: tpu_custom_call.1
$region0: #{tpu_custom_call.1}
  #allocation0 [shape = 'u32[]', space=smem, size = 0x4, offset = 0x4, fixed_abs, tag = 'smem constant byte address 0x4 - core index']
  #allocation1 [shape = 'u32[144,128]{1,0:T(1,128)}', space=vmem, size = 0x12000, scoped, tag = 'internal scratch']
  %s0 = inlined_call_operand.vmem [shape: f32[16,32], index: 0, kind: input, shape index: {}]
  %s1 = inlined_call_operand.vmem [shape: f32[2,6,32,16], index: 1, kind: input, shape index: {}]
  %s2 = inlined_call_operand.vmem [shape: f32[2,6,1,16], index: 2, kind: input, shape index: {}]
  %s3 = inlined_call_operand.vmem [shape: f32[2,2,16,32], index: 3, kind: input, shape index: {}]
  %s4 = inlined_call_operand.vmem [shape: f32[2,32,64], index: 4, kind: input, shape index: {}]
  %s5 = inlined_call_operand.vmem [shape: f32[2,1,64], index: 5, kind: input, shape index: {}]
  %s6 = inlined_call_operand.vmem [shape: f32[2,64,32], index: 6, kind: input, shape index: {}]
  %s7 = inlined_call_operand.vmem [shape: f32[2,6,32], index: 7, kind: input, shape index: {}]
  %s8 = inlined_call_operand.hbm [shape: f32[16,32], index: 8, kind: output, shape index: {}]
  %s9 = sld [smem:[#allocation0]]
  $region69: #{tpu_custom_call.1} parent=0
    _
  %s11 = ssub.s32 1, %s9
  %s12 = scalar_select 0, %s11, %s9
  $region1: #{tpu_custom_call.1} parent=0
    #allocation2 [shape = 'u8[8192]{0}', space=vmem, size = 0x2000, scoped, tag = 'output window, operand 0, single buffered']
    #allocation3 [shape = 's32[2]{0}', space=sflag, size = 0x8, scoped, tag = 'scoped memory for tpu_custom_call.1']
    %13 = vsyncpa [#allocation3], 0
    loop: start=0, step=1, limit=4
    $region2: #{tpu_custom_call.1} parent=1 // loop_pre_header
      _
    $region3: #{tpu_custom_call.1} parent=1 // loop_header
      %s15 = sphi 0, %s19
      %p16 = scmp.ge.s32.totalorder %s15, 4
      %s23 = sphi 0, %s23
      %s25 = sphi 0, %s23
      %s26 = sphi 0, %s25
      %s40 = sphi 0, %s26
      %s46 = sphi 0, %s48
      %s49 = sphi 0, %s46
      %s50 = sphi 0, %s49
      %s66 = sphi 0, %s50
      %s72 = sphi 0, %s74
      %s75 = sphi 0, %s72
      %s76 = sphi 0, %s75
      %s92 = sphi 0, %s76
      %s98 = sphi 0, %s100
      %s101 = sphi 0, %s98
      %s102 = sphi 0, %s101
      %s118 = sphi 0, %s102
      %s124 = sphi 0, %s126
      %s127 = sphi 0, %s124
      %s128 = sphi 0, %s127
      %s144 = sphi 0, %s128
      %s150 = sphi 0, %s152
      %s153 = sphi 0, %s150
      %s154 = sphi 0, %s153
      %s170 = sphi 0, %s154
      %s176 = sphi 0, %s178
      %s179 = sphi 0, %s176
      %s180 = sphi 0, %s179
      %s196 = sphi 0, %s180
      %s202 = sphi 0, %s204
      %s205 = sphi 0, %s202
      %s206 = sphi 0, %s205
      %s222 = sphi 0, %s206
      %s226 = sphi 0, %s226
      %s228 = sphi 0, %s226
      %s229 = sphi 0, %s228
      %s243 = sphi 0, %s229
    $region4: #{tpu_custom_call.1} parent=1 // loop_header_branch
      %18 = sbr.rel (%p16) target = $region8
    $region5: #{tpu_custom_call.1} parent=1 // loop_body
      %s20 = ssub.s32 %s15, 1
      %s21 = ssub.s32 %s15, 2
      %s22 = sadd.s32 %s15, 1
      %s24 = sadd.s32 %s23, 1
      %p27 = scmp.eq.s32.totalorder %s15, 1
      %p28 = scmp.ne.s32.totalorder %s23, %s25
      %p29 = scmp.eq.s32.totalorder %s15, 0
      %p30 = por %p28, %p29
      %p31 = scmp.ne.s32.totalorder %s23, %s25
      %p32 = scmp.eq.s32.totalorder %s20, 1
      %p33 = por %p31, %p32
      %p34 = scmp.ne.s32.totalorder %s25, %s26
      %p35 = scmp.eq.s32.totalorder %s20, 0
      %p36 = por %p34, %p35
      %p37 = scmp.ne.s32.totalorder %s25, %s26
      %p38 = scmp.eq.s32.totalorder %s21, 1
      %p39 = por %p37, %p38
      %p41 = scmp.ne.s32.totalorder %s26, %s40
      %p42 = scmp.eq.s32.totalorder %s21, 0
      %p43 = por %p41, %p42
      %s44 = ssub.s32 %s15, %s22
      %p45 = scmp.eq.s32.totalorder %s44, 0
      %s47 = sadd.s32 %s46, 1
      %s48 = scalar_select %p45, %s46, %s47
      %p51 = pneg %p45
      %p52 = scmp.eq.s32.totalorder %s15, 1
      %p53 = por %p51, %p52
      %p54 = scmp.ne.s32.totalorder %s46, %s49
      %p55 = scmp.eq.s32.totalorder %s15, 0
      %p56 = por %p54, %p55
      %p57 = scmp.ne.s32.totalorder %s46, %s49
      %p58 = scmp.eq.s32.totalorder %s20, 1
      %p59 = por %p57, %p58
      %p60 = scmp.ne.s32.totalorder %s49, %s50
      %p61 = scmp.eq.s32.totalorder %s20, 0
      %p62 = por %p60, %p61
      %p63 = scmp.ne.s32.totalorder %s49, %s50
      %p64 = scmp.eq.s32.totalorder %s21, 1
      %p65 = por %p63, %p64
      %p67 = scmp.ne.s32.totalorder %s50, %s66
      %p68 = scmp.eq.s32.totalorder %s21, 0
      %p69 = por %p67, %p68
      %s70 = ssub.s32 %s15, %s22
      %p71 = scmp.eq.s32.totalorder %s70, 0
      %s73 = sadd.s32 %s72, 1
      %s74 = scalar_select %p71, %s72, %s73
      %p77 = pneg %p71
      %p78 = scmp.eq.s32.totalorder %s15, 1
      %p79 = por %p77, %p78
      %p80 = scmp.ne.s32.totalorder %s72, %s75
      %p81 = scmp.eq.s32.totalorder %s15, 0
      %p82 = por %p80, %p81
      %p83 = scmp.ne.s32.totalorder %s72, %s75
      %p84 = scmp.eq.s32.totalorder %s20, 1
      %p85 = por %p83, %p84
      %p86 = scmp.ne.s32.totalorder %s75, %s76
      %p87 = scmp.eq.s32.totalorder %s20, 0
      %p88 = por %p86, %p87
      %p89 = scmp.ne.s32.totalorder %s75, %s76
      %p90 = scmp.eq.s32.totalorder %s21, 1
      %p91 = por %p89, %p90
      %p93 = scmp.ne.s32.totalorder %s76, %s92
      %p94 = scmp.eq.s32.totalorder %s21, 0
      %p95 = por %p93, %p94
      %s96 = ssub.s32 %s15, %s22
      %p97 = scmp.eq.s32.totalorder %s96, 0
      %s99 = sadd.s32 %s98, 1
      %s100 = scalar_select %p97, %s98, %s99
      %p103 = pneg %p97
      %p104 = scmp.eq.s32.totalorder %s15, 1
      %p105 = por %p103, %p104
      %p106 = scmp.ne.s32.totalorder %s98, %s101
      %p107 = scmp.eq.s32.totalorder %s15, 0
      %p108 = por %p106, %p107
      %p109 = scmp.ne.s32.totalorder %s98, %s101
      %p110 = scmp.eq.s32.totalorder %s20, 1
      %p111 = por %p109, %p110
      %p112 = scmp.ne.s32.totalorder %s101, %s102
      %p113 = scmp.eq.s32.totalorder %s20, 0
      %p114 = por %p112, %p113
      %p115 = scmp.ne.s32.totalorder %s101, %s102
      %p116 = scmp.eq.s32.totalorder %s21, 1
      %p117 = por %p115, %p116
      %p119 = scmp.ne.s32.totalorder %s102, %s118
      %p120 = scmp.eq.s32.totalorder %s21, 0
      %p121 = por %p119, %p120
      %s122 = ssub.s32 %s15, %s22
      %p123 = scmp.eq.s32.totalorder %s122, 0
      %s125 = sadd.s32 %s124, 1
      %s126 = scalar_select %p123, %s124, %s125
      %p129 = pneg %p123
      %p130 = scmp.eq.s32.totalorder %s15, 1
      %p131 = por %p129, %p130
      %p132 = scmp.ne.s32.totalorder %s124, %s127
      %p133 = scmp.eq.s32.totalorder %s15, 0
      %p134 = por %p132, %p133
      %p135 = scmp.ne.s32.totalorder %s124, %s127
      %p136 = scmp.eq.s32.totalorder %s20, 1
      %p137 = por %p135, %p136
      %p138 = scmp.ne.s32.totalorder %s127, %s128
      %p139 = scmp.eq.s32.totalorder %s20, 0
      %p140 = por %p138, %p139
      %p141 = scmp.ne.s32.totalorder %s127, %s128
      %p142 = scmp.eq.s32.totalorder %s21, 1
      %p143 = por %p141, %p142
      %p145 = scmp.ne.s32.totalorder %s128, %s144
      %p146 = scmp.eq.s32.totalorder %s21, 0
      %p147 = por %p145, %p146
      %s148 = ssub.s32 %s15, %s22
      %p149 = scmp.eq.s32.totalorder %s148, 0
      %s151 = sadd.s32 %s150, 1
      %s152 = scalar_select %p149, %s150, %s151
      %p155 = pneg %p149
      %p156 = scmp.eq.s32.totalorder %s15, 1
      %p157 = por %p155, %p156
      %p158 = scmp.ne.s32.totalorder %s150, %s153
      %p159 = scmp.eq.s32.totalorder %s15, 0
      %p160 = por %p158, %p159
      %p161 = scmp.ne.s32.totalorder %s150, %s153
      %p162 = scmp.eq.s32.totalorder %s20, 1
      %p163 = por %p161, %p162
      %p164 = scmp.ne.s32.totalorder %s153, %s154
      %p165 = scmp.eq.s32.totalorder %s20, 0
      %p166 = por %p164, %p165
      %p167 = scmp.ne.s32.totalorder %s153, %s154
      %p168 = scmp.eq.s32.totalorder %s21, 1
      %p169 = por %p167, %p168
      %p171 = scmp.ne.s32.totalorder %s154, %s170
      %p172 = scmp.eq.s32.totalorder %s21, 0
      %p173 = por %p171, %p172
      %s174 = ssub.s32 %s15, %s22
      %p175 = scmp.eq.s32.totalorder %s174, 0
      %s177 = sadd.s32 %s176, 1
      %s178 = scalar_select %p175, %s176, %s177
      %p181 = pneg %p175
      %p182 = scmp.eq.s32.totalorder %s15, 1
      %p183 = por %p181, %p182
      %p184 = scmp.ne.s32.totalorder %s176, %s179
      %p185 = scmp.eq.s32.totalorder %s15, 0
      %p186 = por %p184, %p185
      %p187 = scmp.ne.s32.totalorder %s176, %s179
      %p188 = scmp.eq.s32.totalorder %s20, 1
      %p189 = por %p187, %p188
      %p190 = scmp.ne.s32.totalorder %s179, %s180
      %p191 = scmp.eq.s32.totalorder %s20, 0
      %p192 = por %p190, %p191
      %p193 = scmp.ne.s32.totalorder %s179, %s180
      %p194 = scmp.eq.s32.totalorder %s21, 1
      %p195 = por %p193, %p194
      %p197 = scmp.ne.s32.totalorder %s180, %s196
      %p198 = scmp.eq.s32.totalorder %s21, 0
      %p199 = por %p197, %p198
      %s200 = ssub.s32 %s15, %s22
      %p201 = scmp.eq.s32.totalorder %s200, 0
      %s203 = sadd.s32 %s202, 1
      %s204 = scalar_select %p201, %s202, %s203
      %p207 = pneg %p201
      %p208 = scmp.eq.s32.totalorder %s15, 1
      %p209 = por %p207, %p208
      %p210 = scmp.ne.s32.totalorder %s202, %s205
      %p211 = scmp.eq.s32.totalorder %s15, 0
      %p212 = por %p210, %p211
      %p213 = scmp.ne.s32.totalorder %s202, %s205
      %p214 = scmp.eq.s32.totalorder %s20, 1
      %p215 = por %p213, %p214
      %p216 = scmp.ne.s32.totalorder %s205, %s206
      %p217 = scmp.eq.s32.totalorder %s20, 0
      %p218 = por %p216, %p217
      %p219 = scmp.ne.s32.totalorder %s205, %s206
      %p220 = scmp.eq.s32.totalorder %s21, 1
      %p221 = por %p219, %p220
      %p223 = scmp.ne.s32.totalorder %s206, %s222
      %p224 = scmp.eq.s32.totalorder %s21, 0
      %p225 = por %p223, %p224
      %s227 = sadd.s32 %s226, 1
      %p230 = scmp.eq.s32.totalorder %s15, 1
      %p231 = scmp.ne.s32.totalorder %s226, %s228
      %p232 = scmp.eq.s32.totalorder %s15, 0
      %p233 = por %p231, %p232
      %p234 = scmp.ne.s32.totalorder %s226, %s228
      %p235 = scmp.eq.s32.totalorder %s20, 1
      %p236 = por %p234, %p235
      %p237 = scmp.ne.s32.totalorder %s228, %s229
      %p238 = scmp.eq.s32.totalorder %s20, 0
      %p239 = por %p237, %p238
      %p240 = scmp.ne.s32.totalorder %s228, %s229
      %p241 = scmp.eq.s32.totalorder %s21, 1
      %p242 = por %p240, %p241
      %p244 = scmp.ne.s32.totalorder %s229, %s243
      %p245 = scmp.eq.s32.totalorder %s21, 0
      %p246 = por %p244, %p245
      %p247 = scmp.le.s32.totalorder 1, %s15
      %p248 = scmp.lt.s32.totalorder %s15, 3
      %p249 = pnand %p247, %p248
      %p250 = pneg %p249
      // Predicated region
      $region9: #{tpu_custom_call.1} parent=5 // pred_check
        _
      $region10: #{tpu_custom_call.1} parent=5 // pred_check_branch
        %252 = sbr.rel (%p249) target = $region12
      $region11: #{tpu_custom_call.1} parent=5 // pred_region
        %s253 = ssub.s32 %s15, 1
        // Predicated region
        $region13: #{tpu_custom_call.1} parent=11 // pred_check
          %p254 = pneg %p36
        $region14: #{tpu_custom_call.1} parent=11 // pred_check_branch
          %256 = sbr.rel (%p254) target = $region16
        $region15: #{tpu_custom_call.1} parent=11 // pred_region
          _
        $region16: #{tpu_custom_call.1} parent=11 // pred_fallthru
          _
      $region12: #{tpu_custom_call.1} parent=5 // pred_fallthru
        _
      %p257 = scmp.lt.s32.totalorder %s15, 2
      // Predicated region
      $region17: #{tpu_custom_call.1} parent=5 // pred_check
        %p258 = pneg %p257
      $region18: #{tpu_custom_call.1} parent=5 // pred_check_branch
        %260 = sbr.rel (%p258) target = $region20
      $region19: #{tpu_custom_call.1} parent=5 // pred_region
        // Predicated region
        $region21: #{tpu_custom_call.1} parent=19 // pred_check
          %p261 = pneg %p56
        $region22: #{tpu_custom_call.1} parent=19 // pred_check_branch
          %263 = sbr.rel (%p261) target = $region24
        $region23: #{tpu_custom_call.1} parent=19 // pred_region
          %p264 = scmp.lt.s32.totalorder %s15, 1
          %s265 = scalar_select %p264, %s15, 1
          %s266 = smul.addr %s265, 24
          %s267 = smul.addr %s266, 8
          %s268 = scalar_lea.vmem %s1, %s267
        $region24: #{tpu_custom_call.1} parent=19 // pred_fallthru
          _
        // Predicated region
        $region25: #{tpu_custom_call.1} parent=19 // pred_check
          %p269 = pneg %p82
        $region26: #{tpu_custom_call.1} parent=19 // pred_check_branch
          %271 = sbr.rel (%p269) target = $region28
        $region27: #{tpu_custom_call.1} parent=19 // pred_region
          %p272 = scmp.lt.s32.totalorder %s15, 1
          %s273 = scalar_select %p272, %s15, 1
          %s274 = smul.addr %s273, 6
          %s275 = scalar_lea.vmem %s2, %s274
        $region28: #{tpu_custom_call.1} parent=19 // pred_fallthru
          _
        // Predicated region
        $region29: #{tpu_custom_call.1} parent=19 // pred_check
          %p276 = pneg %p108
        $region30: #{tpu_custom_call.1} parent=19 // pred_check_branch
          %278 = sbr.rel (%p276) target = $region32
        $region31: #{tpu_custom_call.1} parent=19 // pred_region
          %p279 = scmp.lt.s32.totalorder %s15, 1
          %s280 = scalar_select %p279, %s15, 1
          %s281 = smul.addr %s280, 4
          %s282 = smul.addr %s281, 8
          %s283 = scalar_lea.vmem %s3, %s282
        $region32: #{tpu_custom_call.1} parent=19 // pred_fallthru
          _
        // Predicated region
        $region33: #{tpu_custom_call.1} parent=19 // pred_check
          %p284 = pneg %p134
        $region34: #{tpu_custom_call.1} parent=19 // pred_check_branch
          %286 = sbr.rel (%p284) target = $region36
        $region35: #{tpu_custom_call.1} parent=19 // pred_region
          %p287 = scmp.lt.s32.totalorder %s15, 1
          %s288 = scalar_select %p287, %s15, 1
          %s289 = smul.addr %s288, 4
          %s290 = smul.addr %s289, 8
          %s291 = scalar_lea.vmem %s4, %s290
        $region36: #{tpu_custom_call.1} parent=19 // pred_fallthru
          _
        // Predicated region
        $region37: #{tpu_custom_call.1} parent=19 // pred_check
          %p292 = pneg %p160
        $region38: #{tpu_custom_call.1} parent=19 // pred_check_branch
          %294 = sbr.rel (%p292) target = $region40
        $region39: #{tpu_custom_call.1} parent=19 // pred_region
          %p295 = scmp.lt.s32.totalorder %s15, 1
          %s296 = scalar_select %p295, %s15, 1
          %s297 = scalar_lea.vmem %s5, %s296
        $region40: #{tpu_custom_call.1} parent=19 // pred_fallthru
          _
        // Predicated region
        $region41: #{tpu_custom_call.1} parent=19 // pred_check
          %p298 = pneg %p186
        $region42: #{tpu_custom_call.1} parent=19 // pred_check_branch
          %300 = sbr.rel (%p298) target = $region44
        $region43: #{tpu_custom_call.1} parent=19 // pred_region
          %p301 = scmp.lt.s32.totalorder %s15, 1
          %s302 = scalar_select %p301, %s15, 1
          %s303 = smul.addr %s302, 8
          %s304 = smul.addr %s303, 8
          %s305 = scalar_lea.vmem %s6, %s304
        $region44: #{tpu_custom_call.1} parent=19 // pred_fallthru
          _
        // Predicated region
        $region45: #{tpu_custom_call.1} parent=19 // pred_check
          %p306 = pneg %p212
        $region46: #{tpu_custom_call.1} parent=19 // pred_check_branch
          %308 = sbr.rel (%p306) target = $region48
        $region47: #{tpu_custom_call.1} parent=19 // pred_region
          %p309 = scmp.lt.s32.totalorder %s15, 1
          %s310 = scalar_select %p309, %s15, 1
          %s311 = smul.addr %s310, 8
          %s312 = scalar_lea.vmem %s7, %s311
        $region48: #{tpu_custom_call.1} parent=19 // pred_fallthru
          _
      $region20: #{tpu_custom_call.1} parent=5 // pred_fallthru
        _
      %p313 = scmp.le.s32.totalorder 1, %s15
      %p314 = scmp.lt.s32.totalorder %s15, 3
      %p315 = pnand %p313, %p314
      %p316 = pneg %p315
      // Predicated region
      $region49: #{tpu_custom_call.1} parent=5 // pred_check
        _
      $region50: #{tpu_custom_call.1} parent=5 // pred_check_branch
        %318 = sbr.rel (%p315) target = $region52
      $region51: #{tpu_custom_call.1} parent=5 // pred_region
        %s319 = ssub.s32 %s15, 1
        %p320 = pneg %p36
        %p321 = pneg %p33
        %p322 = scmp.lt.s32.totalorder %s20, 1
        %s323 = scalar_select %p322, %s20, 1
        %s324 = smul.addr %s323, 24
        %s325 = smul.addr %s324, 8
        %s326 = scalar_lea.vmem %s1, %s325
        %p327 = pneg %p62
        %p328 = pneg %p59
        %p329 = scmp.lt.s32.totalorder %s20, 1
        %s330 = scalar_select %p329, %s20, 1
        %s331 = smul.addr %s330, 6
        %s332 = scalar_lea.vmem %s2, %s331
        %p333 = pneg %p88
        %p334 = pneg %p85
        %p335 = scmp.lt.s32.totalorder %s20, 1
        %s336 = scalar_select %p335, %s20, 1
        %s337 = smul.addr %s336, 4
        %s338 = smul.addr %s337, 8
        %s339 = scalar_lea.vmem %s3, %s338
        %p340 = pneg %p114
        %p341 = pneg %p111
        %p342 = scmp.lt.s32.totalorder %s20, 1
        %s343 = scalar_select %p342, %s20, 1
        %s344 = smul.addr %s343, 4
        %s345 = smul.addr %s344, 8
        %s346 = scalar_lea.vmem %s4, %s345
        %p347 = pneg %p140
        %p348 = pneg %p137
        %p349 = scmp.lt.s32.totalorder %s20, 1
        %s350 = scalar_select %p349, %s20, 1
        %s351 = scalar_lea.vmem %s5, %s350
        %p352 = pneg %p166
        %p353 = pneg %p163
        %p354 = scmp.lt.s32.totalorder %s20, 1
        %s355 = scalar_select %p354, %s20, 1
        %s356 = smul.addr %s355, 8
        %s357 = smul.addr %s356, 8
        %s358 = scalar_lea.vmem %s6, %s357
        %p359 = pneg %p192
        %p360 = pneg %p189
        %p361 = scmp.lt.s32.totalorder %s20, 1
        %s362 = scalar_select %p361, %s20, 1
        %s363 = smul.addr %s362, 8
        %s364 = scalar_lea.vmem %s7, %s363
        %p365 = pneg %p218
        %p366 = pneg %p215
        %p367 = pneg %p239
        %p368 = pneg %p236
        %p369 = scmp.lt.s32.totalorder %s20, 1
        %s370 = scalar_select %p369, %s20, 1
        %s371 = smul.addr %s370, 24
        %s372 = smul.addr %s371, 8
        %s373 = scalar_lea.vmem %s1, %s372
        %p374 = scmp.lt.s32.totalorder %s20, 1
        %s375 = scalar_select %p374, %s20, 1
        %s376 = smul.addr %s375, 6
        %s377 = scalar_lea.vmem %s2, %s376
        %p378 = scmp.lt.s32.totalorder %s20, 1
        %s379 = scalar_select %p378, %s20, 1
        %s380 = smul.addr %s379, 4
        %s381 = smul.addr %s380, 8
        %s382 = scalar_lea.vmem %s3, %s381
        %p383 = scmp.lt.s32.totalorder %s20, 1
        %s384 = scalar_select %p383, %s20, 1
        %s385 = smul.addr %s384, 4
        %s386 = smul.addr %s385, 8
        %s387 = scalar_lea.vmem %s4, %s386
        %p388 = scmp.lt.s32.totalorder %s20, 1
        %s389 = scalar_select %p388, %s20, 1
        %s390 = scalar_lea.vmem %s5, %s389
        %p391 = scmp.lt.s32.totalorder %s20, 1
        %s392 = scalar_select %p391, %s20, 1
        %s393 = smul.addr %s392, 8
        %s394 = smul.addr %s393, 8
        %s395 = scalar_lea.vmem %s6, %s394
        %p396 = scmp.lt.s32.totalorder %s20, 1
        %s397 = scalar_select %p396, %s20, 1
        %s398 = smul.addr %s397, 8
        %s399 = scalar_lea.vmem %s7, %s398
        %p400 = scmp.eq.s32.totalorder %s20, 0
        // Predicated region
        $region53: #{tpu_custom_call.1} parent=51 // pred_check
          %p401 = pneg %p400
        $region54: #{tpu_custom_call.1} parent=51 // pred_check_branch
          %403 = sbr.rel (%p401) target = $region56
        $region55: #{tpu_custom_call.1} parent=51 // pred_region
          %v404 = vld [vmem:[%s0] sm:$0xff]
          %v405 = vld [vmem:[%s0 + $0x8] sm:$0xff]
          %vm406 = vcmask 261120
          %407 = vst.msk [vmem:[#allocation2] sm:$0xff] %vm406, %v404
          %408 = vst.msk [vmem:[#allocation2 + $0x8] sm:$0xff] %vm406, %v405
        $region56: #{tpu_custom_call.1} parent=51 // pred_fallthru
          _
        %v409 = vld [vmem:[#allocation2] sm:$0xff]
        %v410 = vld [vmem:[#allocation2 + $0x8] sm:$0xff]
        %v411 = vld [vmem:[%s399] sm:$0x3f]
        %v412 = vld [vmem:[%s373] sm:$0xff]
        %v413 = vld [vmem:[%s373 + $0x8] sm:$0xff]
        %v414 = vld [vmem:[%s373 + $0x10] sm:$0xff]
        %v415 = vld [vmem:[%s373 + $0x18] sm:$0xff]
        %v416 = vld [vmem:[%s377] sm:$0x1]
        %v418 = vlaneseq
        %v419 = vshrl.u32 %v418, 7
        %v420 = vsub.s32 0, %v419
        %v421 = vrot.slane %v416, %v420
        %vm423 = vcmask 261120
        %v425 = vsel %vm423, %v409, 0
        %v428 = vsel %vm423, %v410, 0
        %430 = vmatprep.subr.mxu0 0.0
        %431 = vmatpush1.msra.mxu0 %v412
        %432 = vmatprep.subr.mxu0 0.0
        %433 = vmatpush1.msra.mxu0 %v413
        %434 = vmatprep.subr.mxu0 0.0
        %435 = vmatpush1.msra.mxu0 %v414
        %436 = vmatprep.subr.mxu0 0.0
        %437 = vmatpush1.msra.mxu0 %v415
        %438 = vmatprep.subr.mxu0 0.0
        %439 = vmatpush1.msra.mxu0 0.0
        %440 = vmatprep.subr.mxu0 0.0
        %441 = vmatpush1.msra.mxu0 0.0
        %442 = vmatprep.subr.mxu0 0.0
        %443 = vmatpush1.msra.mxu0 0.0
        %444 = vmatprep.subr.mxu0 0.0
        %445 = vmatpush1.msra.mxu0 0.0
        %446 = vmatprep.subr.mxu0 0.0
        %447 = vmatpush1.msra.mxu0 0.0
        %448 = vmatprep.subr.mxu0 0.0
        %449 = vmatpush1.msra.mxu0 0.0
        %450 = vmatprep.subr.mxu0 0.0
        %451 = vmatpush1.msra.mxu0 0.0
        %452 = vmatprep.subr.mxu0 0.0
        %453 = vmatpush1.msra.mxu0 0.0
        %454 = vmatprep.subr.mxu0 0.0
        %455 = vmatpush1.msra.mxu0 0.0
        %456 = vmatprep.subr.mxu0 0.0
        %457 = vmatpush1.msra.mxu0 0.0
        %458 = vmatprep.subr.mxu0 0.0
        %459 = vmatpush1.msra.mxu0 0.0
        %460 = vmatprep.subr.mxu0 0.0
        %461 = vmatpush1.msra.mxu0 0.0
        %462 = vmatprep.subr.mxu0 0.0
        %463 = vmatpush1.msra.mxu0 0.0
        %464 = vmatprep.subr.mxu0 0.0
        %465 = vmatpush1.msra.mxu0 0.0
        %466 = vmatprep.subr.mxu0 0.0
        %467 = vmatpush1.msra.mxu0 0.0
        %468 = vmatprep.subr.mxu0 0.0
        %469 = vmatpush1.msra.mxu0 0.0
        %470 = vmatprep.subr.mxu0 0.0
        %471 = vmatpush1.msra.mxu0 0.0
        %472 = vmatprep.subr.mxu0 0.0
        %473 = vmatpush1.msra.mxu0 0.0
        %474 = vmatprep.subr.mxu0 0.0
        %475 = vmatpush1.msra.mxu0 0.0
        %476 = vmatprep.subr.mxu0 0.0
        %477 = vmatpush1.msra.mxu0 0.0
        %478 = vmatprep.subr.mxu0 0.0
        %479 = vmatpush1.msra.mxu0 0.0
        %480 = vmatprep.subr.mxu0 0.0
        %481 = vmatpush1.msra.mxu0 0.0
        %482 = vmatprep.subr.mxu0 0.0
        %483 = vmatpush1.msra.mxu0 0.0
        %484 = vmatprep.subr.mxu0 0.0
        %485 = vmatpush1.msra.mxu0 0.0
        %486 = vmatprep.subr.mxu0 0.0
        %487 = vmatpush1.msra.mxu0 0.0
        %488 = vmatprep.subr.mxu0 0.0
        %489 = vmatpush1.msra.mxu0 0.0
        %490 = vmatprep.subr.mxu0 0.0
        %491 = vmatpush1.msra.mxu0 0.0
        %492 = vmatprep.subr.mxu0 0.0
        %493 = vmatpush1.msra.mxu0 0.0
        %494 = vmatprep.mubr.f32.mxu0 0.0
        %495 = vmatmul.mubr.f32.gmra.mrb[0].mxu0 %v425
        %v496 = vpop.f32.mrb[0].mxu0
        %v497 = vadd.f32 %v421, %v496
        %v498 = vpop.f32.mrb[0].mxu0
        %499 = vmatprep.mubr.f32.mxu0 0.0
        %500 = vmatmul.mubr.f32.gmra.mrb[0].mxu0 %v428
        %v501 = vpop.f32.mrb[0].mxu0
        %v502 = vadd.f32 %v421, %v501
        %v503 = vpop.f32.mrb[0].mxu0
        %504 = vdwg.mxu0
        %s505 = scalar_lea.vmem %s373, 32
        %v506 = vld [vmem:[%s505] sm:$0xff]
        %v507 = vld [vmem:[%s505 + $0x8] sm:$0xff]
        %v508 = vld [vmem:[%s505 + $0x10] sm:$0xff]
        %v509 = vld [vmem:[%s505 + $0x18] sm:$0xff]
        %s510 = scalar_lea.vmem %s377, 1
        %v511 = vld [vmem:[%s510] sm:$0x1]
        %v513 = vlaneseq
        %v514 = vshrl.u32 %v513, 7
        %v515 = vsub.s32 0, %v514
        %v516 = vrot.slane %v511, %v515
        %518 = vmatprep.subr.mxu0 0.0
        %519 = vmatpush1.msra.mxu0 %v506
        %520 = vmatprep.subr.mxu0 0.0
        %521 = vmatpush1.msra.mxu0 %v507
        %522 = vmatprep.subr.mxu0 0.0
        %523 = vmatpush1.msra.mxu0 %v508
        %524 = vmatprep.subr.mxu0 0.0
        %525 = vmatpush1.msra.mxu0 %v509
        %526 = vmatprep.subr.mxu0 0.0
        %527 = vmatpush1.msra.mxu0 0.0
        %528 = vmatprep.subr.mxu0 0.0
        %529 = vmatpush1.msra.mxu0 0.0
        %530 = vmatprep.subr.mxu0 0.0
        %531 = vmatpush1.msra.mxu0 0.0
        %532 = vmatprep.subr.mxu0 0.0
        %533 = vmatpush1.msra.mxu0 0.0
        %534 = vmatprep.subr.mxu0 0.0
        %535 = vmatpush1.msra.mxu0 0.0
        %536 = vmatprep.subr.mxu0 0.0
        %537 = vmatpush1.msra.mxu0 0.0
        %538 = vmatprep.subr.mxu0 0.0
        %539 = vmatpush1.msra.mxu0 0.0
        %540 = vmatprep.subr.mxu0 0.0
        %541 = vmatpush1.msra.mxu0 0.0
        %542 = vmatprep.subr.mxu0 0.0
        %543 = vmatpush1.msra.mxu0 0.0
        %544 = vmatprep.subr.mxu0 0.0
        %545 = vmatpush1.msra.mxu0 0.0
        %546 = vmatprep.subr.mxu0 0.0
        %547 = vmatpush1.msra.mxu0 0.0
        %548 = vmatprep.subr.mxu0 0.0
        %549 = vmatpush1.msra.mxu0 0.0
        %550 = vmatprep.subr.mxu0 0.0
        %551 = vmatpush1.msra.mxu0 0.0
        %552 = vmatprep.subr.mxu0 0.0
        %553 = vmatpush1.msra.mxu0 0.0
        %554 = vmatprep.subr.mxu0 0.0
        %555 = vmatpush1.msra.mxu0 0.0
        %556 = vmatprep.subr.mxu0 0.0
        %557 = vmatpush1.msra.mxu0 0.0
        %558 = vmatprep.subr.mxu0 0.0
        %559 = vmatpush1.msra.mxu0 0.0
        %560 = vmatprep.subr.mxu0 0.0
        %561 = vmatpush1.msra.mxu0 0.0
        %562 = vmatprep.subr.mxu0 0.0
        %563 = vmatpush1.msra.mxu0 0.0
        %564 = vmatprep.subr.mxu0 0.0
        %565 = vmatpush1.msra.mxu0 0.0
        %566 = vmatprep.subr.mxu0 0.0
        %567 = vmatpush1.msra.mxu0 0.0
        %568 = vmatprep.subr.mxu0 0.0
        %569 = vmatpush1.msra.mxu0 0.0
        %570 = vmatprep.subr.mxu0 0.0
        %571 = vmatpush1.msra.mxu0 0.0
        %572 = vmatprep.subr.mxu0 0.0
        %573 = vmatpush1.msra.mxu0 0.0
        %574 = vmatprep.subr.mxu0 0.0
        %575 = vmatpush1.msra.mxu0 0.0
        %576 = vmatprep.subr.mxu0 0.0
        %577 = vmatpush1.msra.mxu0 0.0
        %578 = vmatprep.subr.mxu0 0.0
        %579 = vmatpush1.msra.mxu0 0.0
        %580 = vmatprep.subr.mxu0 0.0
        %581 = vmatpush1.msra.mxu0 0.0
        %582 = vmatprep.mubr.f32.mxu0 0.0
        %583 = vmatmul.mubr.f32.gmra.mrb[0].mxu0 %v425
        %v584 = vpop.f32.mrb[0].mxu0
        %v585 = vadd.f32 %v516, %v584
        %v586 = vpop.f32.mrb[0].mxu0
        %587 = vmatprep.mubr.f32.mxu0 0.0
        %588 = vmatmul.mubr.f32.gmra.mrb[0].mxu0 %v428
        %v589 = vpop.f32.mrb[0].mxu0
        %v590 = vadd.f32 %v516, %v589
        %v591 = vpop.f32.mrb[0].mxu0
        %592 = vdwg.mxu0
        %s593 = scalar_lea.vmem %s373, 64
        %v594 = vld [vmem:[%s593] sm:$0xff]
        %v595 = vld [vmem:[%s593 + $0x8] sm:$0xff]
        %v596 = vld [vmem:[%s593 + $0x10] sm:$0xff]
        %v597 = vld [vmem:[%s593 + $0x18] sm:$0xff]
        %s598 = scalar_lea.vmem %s377, 2
        %v599 = vld [vmem:[%s598] sm:$0x1]
        %v601 = vlaneseq
        %v602 = vshrl.u32 %v601, 7
        %v603 = vsub.s32 0, %v602
        %v604 = vrot.slane %v599, %v603
        %606 = vmatprep.subr.mxu0 0.0
        %607 = vmatpush1.msra.mxu0 %v594
        %608 = vmatprep.subr.mxu0 0.0
        %609 = vmatpush1.msra.mxu0 %v595
        %610 = vmatprep.subr.mxu0 0.0
        %611 = vmatpush1.msra.mxu0 %v596
        %612 = vmatprep.subr.mxu0 0.0
        %613 = vmatpush1.msra.mxu0 %v597
        %614 = vmatprep.subr.mxu0 0.0
        %615 = vmatpush1.msra.mxu0 0.0
        %616 = vmatprep.subr.mxu0 0.0
        %617 = vmatpush1.msra.mxu0 0.0
        %618 = vmatprep.subr.mxu0 0.0
        %619 = vmatpush1.msra.mxu0 0.0
        %620 = vmatprep.subr.mxu0 0.0
        %621 = vmatpush1.msra.mxu0 0.0
        %622 = vmatprep.subr.mxu0 0.0
        %623 = vmatpush1.msra.mxu0 0.0
        %624 = vmatprep.subr.mxu0 0.0
        %625 = vmatpush1.msra.mxu0 0.0
        %626 = vmatprep.subr.mxu0 0.0
        %627 = vmatpush1.msra.mxu0 0.0
        %628 = vmatprep.subr.mxu0 0.0
        %629 = vmatpush1.msra.mxu0 0.0
        %630 = vmatprep.subr.mxu0 0.0
        %631 = vmatpush1.msra.mxu0 0.0
        %632 = vmatprep.subr.mxu0 0.0
        %633 = vmatpush1.msra.mxu0 0.0
        %634 = vmatprep.subr.mxu0 0.0
        %635 = vmatpush1.msra.mxu0 0.0
        %636 = vmatprep.subr.mxu0 0.0
        %637 = vmatpush1.msra.mxu0 0.0
        %638 = vmatprep.subr.mxu0 0.0
        %639 = vmatpush1.msra.mxu0 0.0
        %640 = vmatprep.subr.mxu0 0.0
        %641 = vmatpush1.msra.mxu0 0.0
        %642 = vmatprep.subr.mxu0 0.0
        %643 = vmatpush1.msra.mxu0 0.0
        %644 = vmatprep.subr.mxu0 0.0
        %645 = vmatpush1.msra.mxu0 0.0
        %646 = vmatprep.subr.mxu0 0.0
        %647 = vmatpush1.msra.mxu0 0.0
        %648 = vmatprep.subr.mxu0 0.0
        %649 = vmatpush1.msra.mxu0 0.0
        %650 = vmatprep.subr.mxu0 0.0
        %651 = vmatpush1.msra.mxu0 0.0
        %652 = vmatprep.subr.mxu0 0.0
        %653 = vmatpush1.msra.mxu0 0.0
        %654 = vmatprep.subr.mxu0 0.0
        %655 = vmatpush1.msra.mxu0 0.0
        %656 = vmatprep.subr.mxu0 0.0
        %657 = vmatpush1.msra.mxu0 0.0
        %658 = vmatprep.subr.mxu0 0.0
        %659 = vmatpush1.msra.mxu0 0.0
        %660 = vmatprep.subr.mxu0 0.0
        %661 = vmatpush1.msra.mxu0 0.0
        %662 = vmatprep.subr.mxu0 0.0
        %663 = vmatpush1.msra.mxu0 0.0
        %664 = vmatprep.subr.mxu0 0.0
        %665 = vmatpush1.msra.mxu0 0.0
        %666 = vmatprep.subr.mxu0 0.0
        %667 = vmatpush1.msra.mxu0 0.0
        %668 = vmatprep.subr.mxu0 0.0
        %669 = vmatpush1.msra.mxu0 0.0
        %670 = vmatprep.mubr.f32.mxu0 0.0
        %671 = vmatmul.mubr.f32.gmra.mrb[0].mxu0 %v425
        %v672 = vpop.f32.mrb[0].mxu0
        %v673 = vadd.f32 %v604, %v672
        %v674 = vpop.f32.mrb[0].mxu0
        %675 = vmatprep.mubr.f32.mxu0 0.0
        %676 = vmatmul.mubr.f32.gmra.mrb[0].mxu0 %v428
        %v677 = vpop.f32.mrb[0].mxu0
        %v678 = vadd.f32 %v604, %v677
        %v679 = vpop.f32.mrb[0].mxu0
        %680 = vdwg.mxu0
        %vm681 = vcmask 130048
        %v683 = vsel %vm681, %v497, 0
        %v686 = vsel %vm681, %v585, 0
        %688 = vmatprep.subr.mxu0 0.0
        %689 = vmatpush1.xpose.msra.mxu0 %v686
        %690 = vmatprep.subr.mxu0 0.0
        %691 = vmatpush1.xpose.msra.mxu0 0.0
        %692 = vmatprep.subr.mxu0 0.0
        %693 = vmatpush1.xpose.msra.mxu0 0.0
        %694 = vmatprep.subr.mxu0 0.0
        %695 = vmatpush1.xpose.msra.mxu0 0.0
        %696 = vmatprep.subr.mxu0 0.0
        %697 = vmatpush1.xpose.msra.mxu0 0.0
        %698 = vmatprep.subr.mxu0 0.0
        %699 = vmatpush1.xpose.msra.mxu0 0.0
        %700 = vmatprep.subr.mxu0 0.0
        %701 = vmatpush1.xpose.msra.mxu0 0.0
        %702 = vmatprep.subr.mxu0 0.0
        %703 = vmatpush1.xpose.msra.mxu0 0.0
        %704 = vmatprep.subr.mxu0 0.0
        %705 = vmatpush1.xpose.msra.mxu0 0.0
        %706 = vmatprep.subr.mxu0 0.0
        %707 = vmatpush1.xpose.msra.mxu0 0.0
        %708 = vmatprep.subr.mxu0 0.0
        %709 = vmatpush1.xpose.msra.mxu0 0.0
        %710 = vmatprep.subr.mxu0 0.0
        %711 = vmatpush1.xpose.msra.mxu0 0.0
        %712 = vmatprep.subr.mxu0 0.0
        %713 = vmatpush1.xpose.msra.mxu0 0.0
        %714 = vmatprep.subr.mxu0 0.0
        %715 = vmatpush1.xpose.msra.mxu0 0.0
        %716 = vmatprep.subr.mxu0 0.0
        %717 = vmatpush1.xpose.msra.mxu0 0.0
        %718 = vmatprep.subr.mxu0 0.0
        %719 = vmatpush1.xpose.msra.mxu0 0.0
        %720 = vmatprep.subr.mxu0 0.0
        %721 = vmatpush1.xpose.msra.mxu0 0.0
        %722 = vmatprep.subr.mxu0 0.0
        %723 = vmatpush1.xpose.msra.mxu0 0.0
        %724 = vmatprep.subr.mxu0 0.0
        %725 = vmatpush1.xpose.msra.mxu0 0.0
        %726 = vmatprep.subr.mxu0 0.0
        %727 = vmatpush1.xpose.msra.mxu0 0.0
        %728 = vmatprep.subr.mxu0 0.0
        %729 = vmatpush1.xpose.msra.mxu0 0.0
        %730 = vmatprep.subr.mxu0 0.0
        %731 = vmatpush1.xpose.msra.mxu0 0.0
        %732 = vmatprep.subr.mxu0 0.0
        %733 = vmatpush1.xpose.msra.mxu0 0.0
        %734 = vmatprep.subr.mxu0 0.0
        %735 = vmatpush1.xpose.msra.mxu0 0.0
        %736 = vmatprep.subr.mxu0 0.0
        %737 = vmatpush1.xpose.msra.mxu0 0.0
        %738 = vmatprep.subr.mxu0 0.0
        %739 = vmatpush1.xpose.msra.mxu0 0.0
        %740 = vmatprep.subr.mxu0 0.0
        %741 = vmatpush1.xpose.msra.mxu0 0.0
        %742 = vmatprep.subr.mxu0 0.0
        %743 = vmatpush1.xpose.msra.mxu0 0.0
        %744 = vmatprep.subr.mxu0 0.0
        %745 = vmatpush1.xpose.msra.mxu0 0.0
        %746 = vmatprep.subr.mxu0 0.0
        %747 = vmatpush1.xpose.msra.mxu0 0.0
        %748 = vmatprep.subr.mxu0 0.0
        %749 = vmatpush1.xpose.msra.mxu0 0.0
        %750 = vmatprep.subr.mxu0 0.0
        %751 = vmatpush1.xpose.msra.mxu0 0.0
        %752 = vmatprep.mubr.f32.mxu0 0.0
        %753 = vmatmul.mubr.f32.gmra.mrb[0].mxu0 %v683
        %v754 = vpop.f32.mrb[0].mxu0
        %v755 = vadd.f32 0.0, %v754
        %v756 = vpop.f32.mrb[0].mxu0
        %757 = vdwg.mxu0
        %v758 = vmul.f32 %v755, 0.25
        %vm759 = vcmask 64512
        %v760 = vsel %vm759, %v758, -inf
        %761 = vmax.xlane.f32.xlu0 %v760
        %v762 = vpop.xlane.xlu0 %761
        %v763 = vsub.f32 %v758, %v762
        %v764 = vmul.f32 %v763, 1.442695
        %v765 = vpow.pop %v764
        %v766 = vsel %vm759, %v765, 0.0
        %767 = vadd.xlane.f32.xlu0 %v766
        %v768 = vpop.xlane.xlu0 %767
        %v769 = vrcp.pop %v768
        %v770 = vmul.f32 %v765, %v769
        %v772 = vsel %vm759, %v770, 0
        %774 = vmatprep.subr.mxu0 0.0
        %775 = vmatpush1.msra.mxu0 %v673
        %776 = vmatprep.subr.mxu0 0.0
        %777 = vmatpush1.msra.mxu0 0.0
        %778 = vmatprep.subr.mxu0 0.0
        %779 = vmatpush1.msra.mxu0 0.0
        %780 = vmatprep.subr.mxu0 0.0
        %781 = vmatpush1.msra.mxu0 0.0
        %782 = vmatprep.subr.mxu0 0.0
        %783 = vmatpush1.msra.mxu0 0.0
        %784 = vmatprep.subr.mxu0 0.0
        %785 = vmatpush1.msra.mxu0 0.0
        %786 = vmatprep.subr.mxu0 0.0
        %787 = vmatpush1.msra.mxu0 0.0
        %788 = vmatprep.subr.mxu0 0.0
        %789 = vmatpush1.msra.mxu0 0.0
        %790 = vmatprep.subr.mxu0 0.0
        %791 = vmatpush1.msra.mxu0 0.0
        %792 = vmatprep.subr.mxu0 0.0
        %793 = vmatpush1.msra.mxu0 0.0
        %794 = vmatprep.subr.mxu0 0.0
        %795 = vmatpush1.msra.mxu0 0.0
        %796 = vmatprep.subr.mxu0 0.0
        %797 = vmatpush1.msra.mxu0 0.0
        %798 = vmatprep.subr.mxu0 0.0
        %799 = vmatpush1.msra.mxu0 0.0
        %800 = vmatprep.subr.mxu0 0.0
        %801 = vmatpush1.msra.mxu0 0.0
        %802 = vmatprep.subr.mxu0 0.0
        %803 = vmatpush1.msra.mxu0 0.0
        %804 = vmatprep.subr.mxu0 0.0
        %805 = vmatpush1.msra.mxu0 0.0
        %806 = vmatprep.subr.mxu0 0.0
        %807 = vmatpush1.msra.mxu0 0.0
        %808 = vmatprep.subr.mxu0 0.0
        %809 = vmatpush1.msra.mxu0 0.0
        %810 = vmatprep.subr.mxu0 0.0
        %811 = vmatpush1.msra.mxu0 0.0
        %812 = vmatprep.subr.mxu0 0.0
        %813 = vmatpush1.msra.mxu0 0.0
        %814 = vmatprep.subr.mxu0 0.0
        %815 = vmatpush1.msra.mxu0 0.0
        %816 = vmatprep.subr.mxu0 0.0
        %817 = vmatpush1.msra.mxu0 0.0
        %818 = vmatprep.subr.mxu0 0.0
        %819 = vmatpush1.msra.mxu0 0.0
        %820 = vmatprep.subr.mxu0 0.0
        %821 = vmatpush1.msra.mxu0 0.0
        %822 = vmatprep.subr.mxu0 0.0
        %823 = vmatpush1.msra.mxu0 0.0
        %824 = vmatprep.subr.mxu0 0.0
        %825 = vmatpush1.msra.mxu0 0.0
        %826 = vmatprep.subr.mxu0 0.0
        %827 = vmatpush1.msra.mxu0 0.0
        %828 = vmatprep.subr.mxu0 0.0
        %829 = vmatpush1.msra.mxu0 0.0
        %830 = vmatprep.subr.mxu0 0.0
        %831 = vmatpush1.msra.mxu0 0.0
        %832 = vmatprep.subr.mxu0 0.0
        %833 = vmatpush1.msra.mxu0 0.0
        %834 = vmatprep.subr.mxu0 0.0
        %835 = vmatpush1.msra.mxu0 0.0
        %836 = vmatprep.subr.mxu0 0.0
        %837 = vmatpush1.msra.mxu0 0.0
        %838 = vmatprep.mubr.f32.mxu0 0.0
        %839 = vmatmul.mubr.f32.gmra.mrb[0].mxu0 %v772
        %v840 = vpop.f32.mrb[0].mxu0
        %v841 = vadd.f32 0.0, %v840
        %v842 = vpop.f32.mrb[0].mxu0
        %843 = vdwg.mxu0
        %v845 = vsel %vm681, %v502, 0
        %v848 = vsel %vm681, %v590, 0
        %850 = vmatprep.subr.mxu0 0.0
        %851 = vmatpush1.xpose.msra.mxu0 %v848
        %852 = vmatprep.subr.mxu0 0.0
        %853 = vmatpush1.xpose.msra.mxu0 0.0
        %854 = vmatprep.subr.mxu0 0.0
        %855 = vmatpush1.xpose.msra.mxu0 0.0
        %856 = vmatprep.subr.mxu0 0.0
        %857 = vmatpush1.xpose.msra.mxu0 0.0
        %858 = vmatprep.subr.mxu0 0.0
        %859 = vmatpush1.xpose.msra.mxu0 0.0
        %860 = vmatprep.subr.mxu0 0.0
        %861 = vmatpush1.xpose.msra.mxu0 0.0
        %862 = vmatprep.subr.mxu0 0.0
        %863 = vmatpush1.xpose.msra.mxu0 0.0
        %864 = vmatprep.subr.mxu0 0.0
        %865 = vmatpush1.xpose.msra.mxu0 0.0
        %866 = vmatprep.subr.mxu0 0.0
        %867 = vmatpush1.xpose.msra.mxu0 0.0
        %868 = vmatprep.subr.mxu0 0.0
        %869 = vmatpush1.xpose.msra.mxu0 0.0
        %870 = vmatprep.subr.mxu0 0.0
        %871 = vmatpush1.xpose.msra.mxu0 0.0
        %872 = vmatprep.subr.mxu0 0.0
        %873 = vmatpush1.xpose.msra.mxu0 0.0
        %874 = vmatprep.subr.mxu0 0.0
        %875 = vmatpush1.xpose.msra.mxu0 0.0
        %876 = vmatprep.subr.mxu0 0.0
        %877 = vmatpush1.xpose.msra.mxu0 0.0
        %878 = vmatprep.subr.mxu0 0.0
        %879 = vmatpush1.xpose.msra.mxu0 0.0
        %880 = vmatprep.subr.mxu0 0.0
        %881 = vmatpush1.xpose.msra.mxu0 0.0
        %882 = vmatprep.subr.mxu0 0.0
        %883 = vmatpush1.xpose.msra.mxu0 0.0
        %884 = vmatprep.subr.mxu0 0.0
        %885 = vmatpush1.xpose.msra.mxu0 0.0
        %886 = vmatprep.subr.mxu0 0.0
        %887 = vmatpush1.xpose.msra.mxu0 0.0
        %888 = vmatprep.subr.mxu0 0.0
        %889 = vmatpush1.xpose.msra.mxu0 0.0
        %890 = vmatprep.subr.mxu0 0.0
        %891 = vmatpush1.xpose.msra.mxu0 0.0
        %892 = vmatprep.subr.mxu0 0.0
        %893 = vmatpush1.xpose.msra.mxu0 0.0
        %894 = vmatprep.subr.mxu0 0.0
        %895 = vmatpush1.xpose.msra.mxu0 0.0
        %896 = vmatprep.subr.mxu0 0.0
        %897 = vmatpush1.xpose.msra.mxu0 0.0
        %898 = vmatprep.subr.mxu0 0.0
        %899 = vmatpush1.xpose.msra.mxu0 0.0
        %900 = vmatprep.subr.mxu0 0.0
        %901 = vmatpush1.xpose.msra.mxu0 0.0
        %902 = vmatprep.subr.mxu0 0.0
        %903 = vmatpush1.xpose.msra.mxu0 0.0
        %904 = vmatprep.subr.mxu0 0.0
        %905 = vmatpush1.xpose.msra.mxu0 0.0
        %906 = vmatprep.subr.mxu0 0.0
        %907 = vmatpush1.xpose.msra.mxu0 0.0
        %908 = vmatprep.subr.mxu0 0.0
        %909 = vmatpush1.xpose.msra.mxu0 0.0
        %910 = vmatprep.subr.mxu0 0.0
        %911 = vmatpush1.xpose.msra.mxu0 0.0
        %912 = vmatprep.subr.mxu0 0.0
        %913 = vmatpush1.xpose.msra.mxu0 0.0
        %914 = vmatprep.mubr.f32.mxu0 0.0
        %915 = vmatmul.mubr.f32.gmra.mrb[0].mxu0 %v845
        %v916 = vpop.f32.mrb[0].mxu0
        %v917 = vadd.f32 0.0, %v916
        %v918 = vpop.f32.mrb[0].mxu0
        %919 = vdwg.mxu0
        %v920 = vmul.f32 %v917, 0.25
        %v921 = vsel %vm759, %v920, -inf
        %922 = vmax.xlane.f32.xlu0 %v921
        %v923 = vpop.xlane.xlu0 %922
        %v924 = vsub.f32 %v920, %v923
        %v925 = vmul.f32 %v924, 1.442695
        %v926 = vpow.pop %v925
        %v927 = vsel %vm759, %v926, 0.0
        %928 = vadd.xlane.f32.xlu0 %v927
        %v929 = vpop.xlane.xlu0 %928
        %v930 = vrcp.pop %v929
        %v931 = vmul.f32 %v926, %v930
        %v933 = vsel %vm759, %v931, 0
        %935 = vmatprep.subr.mxu0 0.0
        %936 = vmatpush1.msra.mxu0 %v678
        %937 = vmatprep.subr.mxu0 0.0
        %938 = vmatpush1.msra.mxu0 0.0
        %939 = vmatprep.subr.mxu0 0.0
        %940 = vmatpush1.msra.mxu0 0.0
        %941 = vmatprep.subr.mxu0 0.0
        %942 = vmatpush1.msra.mxu0 0.0
        %943 = vmatprep.subr.mxu0 0.0
        %944 = vmatpush1.msra.mxu0 0.0
        %945 = vmatprep.subr.mxu0 0.0
        %946 = vmatpush1.msra.mxu0 0.0
        %947 = vmatprep.subr.mxu0 0.0
        %948 = vmatpush1.msra.mxu0 0.0
        %949 = vmatprep.subr.mxu0 0.0
        %950 = vmatpush1.msra.mxu0 0.0
        %951 = vmatprep.subr.mxu0 0.0
        %952 = vmatpush1.msra.mxu0 0.0
        %953 = vmatprep.subr.mxu0 0.0
        %954 = vmatpush1.msra.mxu0 0.0
        %955 = vmatprep.subr.mxu0 0.0
        %956 = vmatpush1.msra.mxu0 0.0
        %957 = vmatprep.subr.mxu0 0.0
        %958 = vmatpush1.msra.mxu0 0.0
        %959 = vmatprep.subr.mxu0 0.0
        %960 = vmatpush1.msra.mxu0 0.0
        %961 = vmatprep.subr.mxu0 0.0
        %962 = vmatpush1.msra.mxu0 0.0
        %963 = vmatprep.subr.mxu0 0.0
        %964 = vmatpush1.msra.mxu0 0.0
        %965 = vmatprep.subr.mxu0 0.0
        %966 = vmatpush1.msra.mxu0 0.0
        %967 = vmatprep.subr.mxu0 0.0
        %968 = vmatpush1.msra.mxu0 0.0
        %969 = vmatprep.subr.mxu0 0.0
        %970 = vmatpush1.msra.mxu0 0.0
        %971 = vmatprep.subr.mxu0 0.0
        %972 = vmatpush1.msra.mxu0 0.0
        %973 = vmatprep.subr.mxu0 0.0
        %974 = vmatpush1.msra.mxu0 0.0
        %975 = vmatprep.subr.mxu0 0.0
        %976 = vmatpush1.msra.mxu0 0.0
        %977 = vmatprep.subr.mxu0 0.0
        %978 = vmatpush1.msra.mxu0 0.0
        %979 = vmatprep.subr.mxu0 0.0
        %980 = vmatpush1.msra.mxu0 0.0
        %981 = vmatprep.subr.mxu0 0.0
        %982 = vmatpush1.msra.mxu0 0.0
        %983 = vmatprep.subr.mxu0 0.0
        %984 = vmatpush1.msra.mxu0 0.0
        %985 = vmatprep.subr.mxu0 0.0
        %986 = vmatpush1.msra.mxu0 0.0
        %987 = vmatprep.subr.mxu0 0.0
        %988 = vmatpush1.msra.mxu0 0.0
        %989 = vmatprep.subr.mxu0 0.0
        %990 = vmatpush1.msra.mxu0 0.0
        %991 = vmatprep.subr.mxu0 0.0
        %992 = vmatpush1.msra.mxu0 0.0
        %993 = vmatprep.subr.mxu0 0.0
        %994 = vmatpush1.msra.mxu0 0.0
        %995 = vmatprep.subr.mxu0 0.0
        %996 = vmatpush1.msra.mxu0 0.0
        %997 = vmatprep.subr.mxu0 0.0
        %998 = vmatpush1.msra.mxu0 0.0
        %999 = vmatprep.mubr.f32.mxu0 0.0
        %1000 = vmatmul.mubr.f32.gmra.mrb[0].mxu0 %v933
        %v1001 = vpop.f32.mrb[0].mxu0
        %v1002 = vadd.f32 0.0, %v1001
        %v1003 = vpop.f32.mrb[0].mxu0
        %1004 = vdwg.mxu0
        %v1005 = vld [vmem:[%s382] sm:$0xff]
        %v1006 = vld [vmem:[%s382 + $0x8] sm:$0xff]
        %s1007 = scalar_lea.vmem %s373, 96
        %v1008 = vld [vmem:[%s1007] sm:$0xff]
        %v1009 = vld [vmem:[%s1007 + $0x8] sm:$0xff]
        %v1010 = vld [vmem:[%s1007 + $0x10] sm:$0xff]
        %v1011 = vld [vmem:[%s1007 + $0x18] sm:$0xff]
        %s1012 = scalar_lea.vmem %s377, 3
        %v1013 = vld [vmem:[%s1012] sm:$0x1]
        %v1015 = vlaneseq
        %v1016 = vshrl.u32 %v1015, 7
        %v1017 = vsub.s32 0, %v1016
        %v1018 = vrot.slane %v1013, %v1017
        %1020 = vmatprep.subr.mxu0 0.0
        %1021 = vmatpush1.msra.mxu0 %v1008
        %1022 = vmatprep.subr.mxu0 0.0
        %1023 = vmatpush1.msra.mxu0 %v1009
        %1024 = vmatprep.subr.mxu0 0.0
        %1025 = vmatpush1.msra.mxu0 %v1010
        %1026 = vmatprep.subr.mxu0 0.0
        %1027 = vmatpush1.msra.mxu0 %v1011
        %1028 = vmatprep.subr.mxu0 0.0
        %1029 = vmatpush1.msra.mxu0 0.0
        %1030 = vmatprep.subr.mxu0 0.0
        %1031 = vmatpush1.msra.mxu0 0.0
        %1032 = vmatprep.subr.mxu0 0.0
        %1033 = vmatpush1.msra.mxu0 0.0
        %1034 = vmatprep.subr.mxu0 0.0
        %1035 = vmatpush1.msra.mxu0 0.0
        %1036 = vmatprep.subr.mxu0 0.0
        %1037 = vmatpush1.msra.mxu0 0.0
        %1038 = vmatprep.subr.mxu0 0.0
        %1039 = vmatpush1.msra.mxu0 0.0
        %1040 = vmatprep.subr.mxu0 0.0
        %1041 = vmatpush1.msra.mxu0 0.0
        %1042 = vmatprep.subr.mxu0 0.0
        %1043 = vmatpush1.msra.mxu0 0.0
        %1044 = vmatprep.subr.mxu0 0.0
        %1045 = vmatpush1.msra.mxu0 0.0
        %1046 = vmatprep.subr.mxu0 0.0
        %1047 = vmatpush1.msra.mxu0 0.0
        %1048 = vmatprep.subr.mxu0 0.0
        %1049 = vmatpush1.msra.mxu0 0.0
        %1050 = vmatprep.subr.mxu0 0.0
        %1051 = vmatpush1.msra.mxu0 0.0
        %1052 = vmatprep.subr.mxu0 0.0
        %1053 = vmatpush1.msra.mxu0 0.0
        %1054 = vmatprep.subr.mxu0 0.0
        %1055 = vmatpush1.msra.mxu0 0.0
        %1056 = vmatprep.subr.mxu0 0.0
        %1057 = vmatpush1.msra.mxu0 0.0
        %1058 = vmatprep.subr.mxu0 0.0
        %1059 = vmatpush1.msra.mxu0 0.0
        %1060 = vmatprep.subr.mxu0 0.0
        %1061 = vmatpush1.msra.mxu0 0.0
        %1062 = vmatprep.subr.mxu0 0.0
        %1063 = vmatpush1.msra.mxu0 0.0
        %1064 = vmatprep.subr.mxu0 0.0
        %1065 = vmatpush1.msra.mxu0 0.0
        %1066 = vmatprep.subr.mxu0 0.0
        %1067 = vmatpush1.msra.mxu0 0.0
        %1068 = vmatprep.subr.mxu0 0.0
        %1069 = vmatpush1.msra.mxu0 0.0
        %1070 = vmatprep.subr.mxu0 0.0
        %1071 = vmatpush1.msra.mxu0 0.0
        %1072 = vmatprep.subr.mxu0 0.0
        %1073 = vmatpush1.msra.mxu0 0.0
        %1074 = vmatprep.subr.mxu0 0.0
        %1075 = vmatpush1.msra.mxu0 0.0
        %1076 = vmatprep.subr.mxu0 0.0
        %1077 = vmatpush1.msra.mxu0 0.0
        %1078 = vmatprep.subr.mxu0 0.0
        %1079 = vmatpush1.msra.mxu0 0.0
        %1080 = vmatprep.subr.mxu0 0.0
        %1081 = vmatpush1.msra.mxu0 0.0
        %1082 = vmatprep.subr.mxu0 0.0
        %1083 = vmatpush1.msra.mxu0 0.0
        %1084 = vmatprep.mubr.f32.mxu0 0.0
        %1085 = vmatmul.mubr.f32.gmra.mrb[0].mxu0 %v425
        %v1086 = vpop.f32.mrb[0].mxu0
        %v1087 = vadd.f32 %v1018, %v1086
        %v1088 = vpop.f32.mrb[0].mxu0
        %1089 = vmatprep.mubr.f32.mxu0 0.0
        %1090 = vmatmul.mubr.f32.gmra.mrb[0].mxu0 %v428
        %v1091 = vpop.f32.mrb[0].mxu0
        %v1092 = vadd.f32 %v1018, %v1091
        %v1093 = vpop.f32.mrb[0].mxu0
        %1094 = vdwg.mxu0
        %s1095 = scalar_lea.vmem %s373, 128
        %v1096 = vld [vmem:[%s1095] sm:$0xff]
        %v1097 = vld [vmem:[%s1095 + $0x8] sm:$0xff]
        %v1098 = vld [vmem:[%s1095 + $0x10] sm:$0xff]
        %v1099 = vld [vmem:[%s1095 + $0x18] sm:$0xff]
        %s1100 = scalar_lea.vmem %s377, 4
        %v1101 = vld [vmem:[%s1100] sm:$0x1]
        %v1103 = vlaneseq
        %v1104 = vshrl.u32 %v1103, 7
        %v1105 = vsub.s32 0, %v1104
        %v1106 = vrot.slane %v1101, %v1105
        %1108 = vmatprep.subr.mxu0 0.0
        %1109 = vmatpush1.msra.mxu0 %v1096
        %1110 = vmatprep.subr.mxu0 0.0
        %1111 = vmatpush1.msra.mxu0 %v1097
        %1112 = vmatprep.subr.mxu0 0.0
        %1113 = vmatpush1.msra.mxu0 %v1098
        %1114 = vmatprep.subr.mxu0 0.0
        %1115 = vmatpush1.msra.mxu0 %v1099
        %1116 = vmatprep.subr.mxu0 0.0
        %1117 = vmatpush1.msra.mxu0 0.0
        %1118 = vmatprep.subr.mxu0 0.0
        %1119 = vmatpush1.msra.mxu0 0.0
        %1120 = vmatprep.subr.mxu0 0.0
        %1121 = vmatpush1.msra.mxu0 0.0
        %1122 = vmatprep.subr.mxu0 0.0
        %1123 = vmatpush1.msra.mxu0 0.0
        %1124 = vmatprep.subr.mxu0 0.0
        %1125 = vmatpush1.msra.mxu0 0.0
        %1126 = vmatprep.subr.mxu0 0.0
        %1127 = vmatpush1.msra.mxu0 0.0
        %1128 = vmatprep.subr.mxu0 0.0
        %1129 = vmatpush1.msra.mxu0 0.0
        %1130 = vmatprep.subr.mxu0 0.0
        %1131 = vmatpush1.msra.mxu0 0.0
        %1132 = vmatprep.subr.mxu0 0.0
        %1133 = vmatpush1.msra.mxu0 0.0
        %1134 = vmatprep.subr.mxu0 0.0
        %1135 = vmatpush1.msra.mxu0 0.0
        %1136 = vmatprep.subr.mxu0 0.0
        %1137 = vmatpush1.msra.mxu0 0.0
        %1138 = vmatprep.subr.mxu0 0.0
        %1139 = vmatpush1.msra.mxu0 0.0
        %1140 = vmatprep.subr.mxu0 0.0
        %1141 = vmatpush1.msra.mxu0 0.0
        %1142 = vmatprep.subr.mxu0 0.0
        %1143 = vmatpush1.msra.mxu0 0.0
        %1144 = vmatprep.subr.mxu0 0.0
        %1145 = vmatpush1.msra.mxu0 0.0
        %1146 = vmatprep.subr.mxu0 0.0
        %1147 = vmatpush1.msra.mxu0 0.0
        %1148 = vmatprep.subr.mxu0 0.0
        %1149 = vmatpush1.msra.mxu0 0.0
        %1150 = vmatprep.subr.mxu0 0.0
        %1151 = vmatpush1.msra.mxu0 0.0
        %1152 = vmatprep.subr.mxu0 0.0
        %1153 = vmatpush1.msra.mxu0 0.0
        %1154 = vmatprep.subr.mxu0 0.0
        %1155 = vmatpush1.msra.mxu0 0.0
        %1156 = vmatprep.subr.mxu0 0.0
        %1157 = vmatpush1.msra.mxu0 0.0
        %1158 = vmatprep.subr.mxu0 0.0
        %1159 = vmatpush1.msra.mxu0 0.0
        %1160 = vmatprep.subr.mxu0 0.0
        %1161 = vmatpush1.msra.mxu0 0.0
        %1162 = vmatprep.subr.mxu0 0.0
        %1163 = vmatpush1.msra.mxu0 0.0
        %1164 = vmatprep.subr.mxu0 0.0
        %1165 = vmatpush1.msra.mxu0 0.0
        %1166 = vmatprep.subr.mxu0 0.0
        %1167 = vmatpush1.msra.mxu0 0.0
        %1168 = vmatprep.subr.mxu0 0.0
        %1169 = vmatpush1.msra.mxu0 0.0
        %1170 = vmatprep.subr.mxu0 0.0
        %1171 = vmatpush1.msra.mxu0 0.0
        %1172 = vmatprep.mubr.f32.mxu0 0.0
        %1173 = vmatmul.mubr.f32.gmra.mrb[0].mxu0 %v425
        %v1174 = vpop.f32.mrb[0].mxu0
        %v1175 = vadd.f32 %v1106, %v1174
        %v1176 = vpop.f32.mrb[0].mxu0
        %1177 = vmatprep.mubr.f32.mxu0 0.0
        %1178 = vmatmul.mubr.f32.gmra.mrb[0].mxu0 %v428
        %v1179 = vpop.f32.mrb[0].mxu0
        %v1180 = vadd.f32 %v1106, %v1179
        %v1181 = vpop.f32.mrb[0].mxu0
        %1182 = vdwg.mxu0
        %s1183 = scalar_lea.vmem %s373, 160
        %v1184 = vld [vmem:[%s1183] sm:$0xff]
        %v1185 = vld [vmem:[%s1183 + $0x8] sm:$0xff]
        %v1186 = vld [vmem:[%s1183 + $0x10] sm:$0xff]
        %v1187 = vld [vmem:[%s1183 + $0x18] sm:$0xff]
        %s1188 = scalar_lea.vmem %s377, 5
        %v1189 = vld [vmem:[%s1188] sm:$0x1]
        %v1191 = vlaneseq
        %v1192 = vshrl.u32 %v1191, 7
        %v1193 = vsub.s32 0, %v1192
        %v1194 = vrot.slane %v1189, %v1193
        %1196 = vmatprep.subr.mxu0 0.0
        %1197 = vmatpush1.msra.mxu0 %v1184
        %1198 = vmatprep.subr.mxu0 0.0
        %1199 = vmatpush1.msra.mxu0 %v1185
        %1200 = vmatprep.subr.mxu0 0.0
        %1201 = vmatpush1.msra.mxu0 %v1186
        %1202 = vmatprep.subr.mxu0 0.0
        %1203 = vmatpush1.msra.mxu0 %v1187
        %1204 = vmatprep.subr.mxu0 0.0
        %1205 = vmatpush1.msra.mxu0 0.0
        %1206 = vmatprep.subr.mxu0 0.0
        %1207 = vmatpush1.msra.mxu0 0.0
        %1208 = vmatprep.subr.mxu0 0.0
        %1209 = vmatpush1.msra.mxu0 0.0
        %1210 = vmatprep.subr.mxu0 0.0
        %1211 = vmatpush1.msra.mxu0 0.0
        %1212 = vmatprep.subr.mxu0 0.0
        %1213 = vmatpush1.msra.mxu0 0.0
        %1214 = vmatprep.subr.mxu0 0.0
        %1215 = vmatpush1.msra.mxu0 0.0
        %1216 = vmatprep.subr.mxu0 0.0
        %1217 = vmatpush1.msra.mxu0 0.0
        %1218 = vmatprep.subr.mxu0 0.0
        %1219 = vmatpush1.msra.mxu0 0.0
        %1220 = vmatprep.subr.mxu0 0.0
        %1221 = vmatpush1.msra.mxu0 0.0
        %1222 = vmatprep.subr.mxu0 0.0
        %1223 = vmatpush1.msra.mxu0 0.0
        %1224 = vmatprep.subr.mxu0 0.0
        %1225 = vmatpush1.msra.mxu0 0.0
        %1226 = vmatprep.subr.mxu0 0.0
        %1227 = vmatpush1.msra.mxu0 0.0
        %1228 = vmatprep.subr.mxu0 0.0
        %1229 = vmatpush1.msra.mxu0 0.0
        %1230 = vmatprep.subr.mxu0 0.0
        %1231 = vmatpush1.msra.mxu0 0.0
        %1232 = vmatprep.subr.mxu0 0.0
        %1233 = vmatpush1.msra.mxu0 0.0
        %1234 = vmatprep.subr.mxu0 0.0
        %1235 = vmatpush1.msra.mxu0 0.0
        %1236 = vmatprep.subr.mxu0 0.0
        %1237 = vmatpush1.msra.mxu0 0.0
        %1238 = vmatprep.subr.mxu0 0.0
        %1239 = vmatpush1.msra.mxu0 0.0
        %1240 = vmatprep.subr.mxu0 0.0
        %1241 = vmatpush1.msra.mxu0 0.0
        %1242 = vmatprep.subr.mxu0 0.0
        %1243 = vmatpush1.msra.mxu0 0.0
        %1244 = vmatprep.subr.mxu0 0.0
        %1245 = vmatpush1.msra.mxu0 0.0
        %1246 = vmatprep.subr.mxu0 0.0
        %1247 = vmatpush1.msra.mxu0 0.0
        %1248 = vmatprep.subr.mxu0 0.0
        %1249 = vmatpush1.msra.mxu0 0.0
        %1250 = vmatprep.subr.mxu0 0.0
        %1251 = vmatpush1.msra.mxu0 0.0
        %1252 = vmatprep.subr.mxu0 0.0
        %1253 = vmatpush1.msra.mxu0 0.0
        %1254 = vmatprep.subr.mxu0 0.0
        %1255 = vmatpush1.msra.mxu0 0.0
        %1256 = vmatprep.subr.mxu0 0.0
        %1257 = vmatpush1.msra.mxu0 0.0
        %1258 = vmatprep.subr.mxu0 0.0
        %1259 = vmatpush1.msra.mxu0 0.0
        %1260 = vmatprep.mubr.f32.mxu0 0.0
        %1261 = vmatmul.mubr.f32.gmra.mrb[0].mxu0 %v425
        %v1262 = vpop.f32.mrb[0].mxu0
        %v1263 = vadd.f32 %v1194, %v1262
        %v1264 = vpop.f32.mrb[0].mxu0
        %1265 = vmatprep.mubr.f32.mxu0 0.0
        %1266 = vmatmul.mubr.f32.gmra.mrb[0].mxu0 %v428
        %v1267 = vpop.f32.mrb[0].mxu0
        %v1268 = vadd.f32 %v1194, %v1267
        %v1269 = vpop.f32.mrb[0].mxu0
        %1270 = vdwg.mxu0
        %v1272 = vsel %vm681, %v1087, 0
        %v1275 = vsel %vm681, %v1175, 0
        %1277 = vmatprep.subr.mxu0 0.0
        %1278 = vmatpush1.xpose.msra.mxu0 %v1275
        %1279 = vmatprep.subr.mxu0 0.0
        %1280 = vmatpush1.xpose.msra.mxu0 0.0
        %1281 = vmatprep.subr.mxu0 0.0
        %1282 = vmatpush1.xpose.msra.mxu0 0.0
        %1283 = vmatprep.subr.mxu0 0.0
        %1284 = vmatpush1.xpose.msra.mxu0 0.0
        %1285 = vmatprep.subr.mxu0 0.0
        %1286 = vmatpush1.xpose.msra.mxu0 0.0
        %1287 = vmatprep.subr.mxu0 0.0
        %1288 = vmatpush1.xpose.msra.mxu0 0.0
        %1289 = vmatprep.subr.mxu0 0.0
        %1290 = vmatpush1.xpose.msra.mxu0 0.0
        %1291 = vmatprep.subr.mxu0 0.0
        %1292 = vmatpush1.xpose.msra.mxu0 0.0
        %1293 = vmatprep.subr.mxu0 0.0
        %1294 = vmatpush1.xpose.msra.mxu0 0.0
        %1295 = vmatprep.subr.mxu0 0.0
        %1296 = vmatpush1.xpose.msra.mxu0 0.0
        %1297 = vmatprep.subr.mxu0 0.0
        %1298 = vmatpush1.xpose.msra.mxu0 0.0
        %1299 = vmatprep.subr.mxu0 0.0
        %1300 = vmatpush1.xpose.msra.mxu0 0.0
        %1301 = vmatprep.subr.mxu0 0.0
        %1302 = vmatpush1.xpose.msra.mxu0 0.0
        %1303 = vmatprep.subr.mxu0 0.0
        %1304 = vmatpush1.xpose.msra.mxu0 0.0
        %1305 = vmatprep.subr.mxu0 0.0
        %1306 = vmatpush1.xpose.msra.mxu0 0.0
        %1307 = vmatprep.subr.mxu0 0.0
        %1308 = vmatpush1.xpose.msra.mxu0 0.0
        %1309 = vmatprep.subr.mxu0 0.0
        %1310 = vmatpush1.xpose.msra.mxu0 0.0
        %1311 = vmatprep.subr.mxu0 0.0
        %1312 = vmatpush1.xpose.msra.mxu0 0.0
        %1313 = vmatprep.subr.mxu0 0.0
        %1314 = vmatpush1.xpose.msra.mxu0 0.0
        %1315 = vmatprep.subr.mxu0 0.0
        %1316 = vmatpush1.xpose.msra.mxu0 0.0
        %1317 = vmatprep.subr.mxu0 0.0
        %1318 = vmatpush1.xpose.msra.mxu0 0.0
        %1319 = vmatprep.subr.mxu0 0.0
        %1320 = vmatpush1.xpose.msra.mxu0 0.0
        %1321 = vmatprep.subr.mxu0 0.0
        %1322 = vmatpush1.xpose.msra.mxu0 0.0
        %1323 = vmatprep.subr.mxu0 0.0
        %1324 = vmatpush1.xpose.msra.mxu0 0.0
        %1325 = vmatprep.subr.mxu0 0.0
        %1326 = vmatpush1.xpose.msra.mxu0 0.0
        %1327 = vmatprep.subr.mxu0 0.0
        %1328 = vmatpush1.xpose.msra.mxu0 0.0
        %1329 = vmatprep.subr.mxu0 0.0
        %1330 = vmatpush1.xpose.msra.mxu0 0.0
        %1331 = vmatprep.subr.mxu0 0.0
        %1332 = vmatpush1.xpose.msra.mxu0 0.0
        %1333 = vmatprep.subr.mxu0 0.0
        %1334 = vmatpush1.xpose.msra.mxu0 0.0
        %1335 = vmatprep.subr.mxu0 0.0
        %1336 = vmatpush1.xpose.msra.mxu0 0.0
        %1337 = vmatprep.subr.mxu0 0.0
        %1338 = vmatpush1.xpose.msra.mxu0 0.0
        %1339 = vmatprep.subr.mxu0 0.0
        %1340 = vmatpush1.xpose.msra.mxu0 0.0
        %1341 = vmatprep.mubr.f32.mxu0 0.0
        %1342 = vmatmul.mubr.f32.gmra.mrb[0].mxu0 %v1272
        %v1343 = vpop.f32.mrb[0].mxu0
        %v1344 = vadd.f32 0.0, %v1343
        %v1345 = vpop.f32.mrb[0].mxu0
        %1346 = vdwg.mxu0
        %v1347 = vmul.f32 %v1344, 0.25
        %v1348 = vsel %vm759, %v1347, -inf
        %1349 = vmax.xlane.f32.xlu0 %v1348
        %v1350 = vpop.xlane.xlu0 %1349
        %v1351 = vsub.f32 %v1347, %v1350
        %v1352 = vmul.f32 %v1351, 1.442695
        %v1353 = vpow.pop %v1352
        %v1354 = vsel %vm759, %v1353, 0.0
        %1355 = vadd.xlane.f32.xlu0 %v1354
        %v1356 = vpop.xlane.xlu0 %1355
        %v1357 = vrcp.pop %v1356
        %v1358 = vmul.f32 %v1353, %v1357
        %v1360 = vsel %vm759, %v1358, 0
        %1362 = vmatprep.subr.mxu0 0.0
        %1363 = vmatpush1.msra.mxu0 %v1263
        %1364 = vmatprep.subr.mxu0 0.0
        %1365 = vmatpush1.msra.mxu0 0.0
        %1366 = vmatprep.subr.mxu0 0.0
        %1367 = vmatpush1.msra.mxu0 0.0
        %1368 = vmatprep.subr.mxu0 0.0
        %1369 = vmatpush1.msra.mxu0 0.0
        %1370 = vmatprep.subr.mxu0 0.0
        %1371 = vmatpush1.msra.mxu0 0.0
        %1372 = vmatprep.subr.mxu0 0.0
        %1373 = vmatpush1.msra.mxu0 0.0
        %1374 = vmatprep.subr.mxu0 0.0
        %1375 = vmatpush1.msra.mxu0 0.0
        %1376 = vmatprep.subr.mxu0 0.0
        %1377 = vmatpush1.msra.mxu0 0.0
        %1378 = vmatprep.subr.mxu0 0.0
        %1379 = vmatpush1.msra.mxu0 0.0
        %1380 = vmatprep.subr.mxu0 0.0
        %1381 = vmatpush1.msra.mxu0 0.0
        %1382 = vmatprep.subr.mxu0 0.0
        %1383 = vmatpush1.msra.mxu0 0.0
        %1384 = vmatprep.subr.mxu0 0.0
        %1385 = vmatpush1.msra.mxu0 0.0
        %1386 = vmatprep.subr.mxu0 0.0
        %1387 = vmatpush1.msra.mxu0 0.0
        %1388 = vmatprep.subr.mxu0 0.0
        %1389 = vmatpush1.msra.mxu0 0.0
        %1390 = vmatprep.subr.mxu0 0.0
        %1391 = vmatpush1.msra.mxu0 0.0
        %1392 = vmatprep.subr.mxu0 0.0
        %1393 = vmatpush1.msra.mxu0 0.0
        %1394 = vmatprep.subr.mxu0 0.0
        %1395 = vmatpush1.msra.mxu0 0.0
        %1396 = vmatprep.subr.mxu0 0.0
        %1397 = vmatpush1.msra.mxu0 0.0
        %1398 = vmatprep.subr.mxu0 0.0
        %1399 = vmatpush1.msra.mxu0 0.0
        %1400 = vmatprep.subr.mxu0 0.0
        %1401 = vmatpush1.msra.mxu0 0.0
        %1402 = vmatprep.subr.mxu0 0.0
        %1403 = vmatpush1.msra.mxu0 0.0
        %1404 = vmatprep.subr.mxu0 0.0
        %1405 = vmatpush1.msra.mxu0 0.0
        %1406 = vmatprep.subr.mxu0 0.0
        %1407 = vmatpush1.msra.mxu0 0.0
        %1408 = vmatprep.subr.mxu0 0.0
        %1409 = vmatpush1.msra.mxu0 0.0
        %1410 = vmatprep.subr.mxu0 0.0
        %1411 = vmatpush1.msra.mxu0 0.0
        %1412 = vmatprep.subr.mxu0 0.0
        %1413 = vmatpush1.msra.mxu0 0.0
        %1414 = vmatprep.subr.mxu0 0.0
        %1415 = vmatpush1.msra.mxu0 0.0
        %1416 = vmatprep.subr.mxu0 0.0
        %1417 = vmatpush1.msra.mxu0 0.0
        %1418 = vmatprep.subr.mxu0 0.0
        %1419 = vmatpush1.msra.mxu0 0.0
        %1420 = vmatprep.subr.mxu0 0.0
        %1421 = vmatpush1.msra.mxu0 0.0
        %1422 = vmatprep.subr.mxu0 0.0
        %1423 = vmatpush1.msra.mxu0 0.0
        %1424 = vmatprep.subr.mxu0 0.0
        %1425 = vmatpush1.msra.mxu0 0.0
        %1426 = vmatprep.mubr.f32.mxu0 0.0
        %1427 = vmatmul.mubr.f32.gmra.mrb[0].mxu0 %v1360
        %v1428 = vpop.f32.mrb[0].mxu0
        %v1429 = vadd.f32 0.0, %v1428
        %v1430 = vpop.f32.mrb[0].mxu0
        %1431 = vdwg.mxu0
        %v1433 = vsel %vm681, %v1092, 0
        %v1436 = vsel %vm681, %v1180, 0
        %1438 = vmatprep.subr.mxu0 0.0
        %1439 = vmatpush1.xpose.msra.mxu0 %v1436
        %1440 = vmatprep.subr.mxu0 0.0
        %1441 = vmatpush1.xpose.msra.mxu0 0.0
        %1442 = vmatprep.subr.mxu0 0.0
        %1443 = vmatpush1.xpose.msra.mxu0 0.0
        %1444 = vmatprep.subr.mxu0 0.0
        %1445 = vmatpush1.xpose.msra.mxu0 0.0
        %1446 = vmatprep.subr.mxu0 0.0
        %1447 = vmatpush1.xpose.msra.mxu0 0.0
        %1448 = vmatprep.subr.mxu0 0.0
        %1449 = vmatpush1.xpose.msra.mxu0 0.0
        %1450 = vmatprep.subr.mxu0 0.0
        %1451 = vmatpush1.xpose.msra.mxu0 0.0
        %1452 = vmatprep.subr.mxu0 0.0
        %1453 = vmatpush1.xpose.msra.mxu0 0.0
        %1454 = vmatprep.subr.mxu0 0.0
        %1455 = vmatpush1.xpose.msra.mxu0 0.0
        %1456 = vmatprep.subr.mxu0 0.0
        %1457 = vmatpush1.xpose.msra.mxu0 0.0
        %1458 = vmatprep.subr.mxu0 0.0
        %1459 = vmatpush1.xpose.msra.mxu0 0.0
        %1460 = vmatprep.subr.mxu0 0.0
        %1461 = vmatpush1.xpose.msra.mxu0 0.0
        %1462 = vmatprep.subr.mxu0 0.0
        %1463 = vmatpush1.xpose.msra.mxu0 0.0
        %1464 = vmatprep.subr.mxu0 0.0
        %1465 = vmatpush1.xpose.msra.mxu0 0.0
        %1466 = vmatprep.subr.mxu0 0.0
        %1467 = vmatpush1.xpose.msra.mxu0 0.0
        %1468 = vmatprep.subr.mxu0 0.0
        %1469 = vmatpush1.xpose.msra.mxu0 0.0
        %1470 = vmatprep.subr.mxu0 0.0
        %1471 = vmatpush1.xpose.msra.mxu0 0.0
        %1472 = vmatprep.subr.mxu0 0.0
        %1473 = vmatpush1.xpose.msra.mxu0 0.0
        %1474 = vmatprep.subr.mxu0 0.0
        %1475 = vmatpush1.xpose.msra.mxu0 0.0
        %1476 = vmatprep.subr.mxu0 0.0
        %1477 = vmatpush1.xpose.msra.mxu0 0.0
        %1478 = vmatprep.subr.mxu0 0.0
        %1479 = vmatpush1.xpose.msra.mxu0 0.0
        %1480 = vmatprep.subr.mxu0 0.0
        %1481 = vmatpush1.xpose.msra.mxu0 0.0
        %1482 = vmatprep.subr.mxu0 0.0
        %1483 = vmatpush1.xpose.msra.mxu0 0.0
        %1484 = vmatprep.subr.mxu0 0.0
        %1485 = vmatpush1.xpose.msra.mxu0 0.0
        %1486 = vmatprep.subr.mxu0 0.0
        %1487 = vmatpush1.xpose.msra.mxu0 0.0
        %1488 = vmatprep.subr.mxu0 0.0
        %1489 = vmatpush1.xpose.msra.mxu0 0.0
        %1490 = vmatprep.subr.mxu0 0.0
        %1491 = vmatpush1.xpose.msra.mxu0 0.0
        %1492 = vmatprep.subr.mxu0 0.0
        %1493 = vmatpush1.xpose.msra.mxu0 0.0
        %1494 = vmatprep.subr.mxu0 0.0
        %1495 = vmatpush1.xpose.msra.mxu0 0.0
        %1496 = vmatprep.subr.mxu0 0.0
        %1497 = vmatpush1.xpose.msra.mxu0 0.0
        %1498 = vmatprep.subr.mxu0 0.0
        %1499 = vmatpush1.xpose.msra.mxu0 0.0
        %1500 = vmatprep.subr.mxu0 0.0
        %1501 = vmatpush1.xpose.msra.mxu0 0.0
        %1502 = vmatprep.mubr.f32.mxu0 0.0
        %1503 = vmatmul.mubr.f32.gmra.mrb[0].mxu0 %v1433
        %v1504 = vpop.f32.mrb[0].mxu0
        %v1505 = vadd.f32 0.0, %v1504
        %v1506 = vpop.f32.mrb[0].mxu0
        %1507 = vdwg.mxu0
        %v1508 = vmul.f32 %v1505, 0.25
        %v1509 = vsel %vm759, %v1508, -inf
        %1510 = vmax.xlane.f32.xlu0 %v1509
        %v1511 = vpop.xlane.xlu0 %1510
        %v1512 = vsub.f32 %v1508, %v1511
        %v1513 = vmul.f32 %v1512, 1.442695
        %v1514 = vpow.pop %v1513
        %v1515 = vsel %vm759, %v1514, 0.0
        %1516 = vadd.xlane.f32.xlu0 %v1515
        %v1517 = vpop.xlane.xlu0 %1516
        %v1518 = vrcp.pop %v1517
        %v1519 = vmul.f32 %v1514, %v1518
        %v1521 = vsel %vm759, %v1519, 0
        %1523 = vmatprep.subr.mxu0 0.0
        %1524 = vmatpush1.msra.mxu0 %v1268
        %1525 = vmatprep.subr.mxu0 0.0
        %1526 = vmatpush1.msra.mxu0 0.0
        %1527 = vmatprep.subr.mxu0 0.0
        %1528 = vmatpush1.msra.mxu0 0.0
        %1529 = vmatprep.subr.mxu0 0.0
        %1530 = vmatpush1.msra.mxu0 0.0
        %1531 = vmatprep.subr.mxu0 0.0
        %1532 = vmatpush1.msra.mxu0 0.0
        %1533 = vmatprep.subr.mxu0 0.0
        %1534 = vmatpush1.msra.mxu0 0.0
        %1535 = vmatprep.subr.mxu0 0.0
        %1536 = vmatpush1.msra.mxu0 0.0
        %1537 = vmatprep.subr.mxu0 0.0
        %1538 = vmatpush1.msra.mxu0 0.0
        %1539 = vmatprep.subr.mxu0 0.0
        %1540 = vmatpush1.msra.mxu0 0.0
        %1541 = vmatprep.subr.mxu0 0.0
        %1542 = vmatpush1.msra.mxu0 0.0
        %1543 = vmatprep.subr.mxu0 0.0
        %1544 = vmatpush1.msra.mxu0 0.0
        %1545 = vmatprep.subr.mxu0 0.0
        %1546 = vmatpush1.msra.mxu0 0.0
        %1547 = vmatprep.subr.mxu0 0.0
        %1548 = vmatpush1.msra.mxu0 0.0
        %1549 = vmatprep.subr.mxu0 0.0
        %1550 = vmatpush1.msra.mxu0 0.0
        %1551 = vmatprep.subr.mxu0 0.0
        %1552 = vmatpush1.msra.mxu0 0.0
        %1553 = vmatprep.subr.mxu0 0.0
        %1554 = vmatpush1.msra.mxu0 0.0
        %1555 = vmatprep.subr.mxu0 0.0
        %1556 = vmatpush1.msra.mxu0 0.0
        %1557 = vmatprep.subr.mxu0 0.0
        %1558 = vmatpush1.msra.mxu0 0.0
        %1559 = vmatprep.subr.mxu0 0.0
        %1560 = vmatpush1.msra.mxu0 0.0
        %1561 = vmatprep.subr.mxu0 0.0
        %1562 = vmatpush1.msra.mxu0 0.0
        %1563 = vmatprep.subr.mxu0 0.0
        %1564 = vmatpush1.msra.mxu0 0.0
        %1565 = vmatprep.subr.mxu0 0.0
        %1566 = vmatpush1.msra.mxu0 0.0
        %1567 = vmatprep.subr.mxu0 0.0
        %1568 = vmatpush1.msra.mxu0 0.0
        %1569 = vmatprep.subr.mxu0 0.0
        %1570 = vmatpush1.msra.mxu0 0.0
        %1571 = vmatprep.subr.mxu0 0.0
        %1572 = vmatpush1.msra.mxu0 0.0
        %1573 = vmatprep.subr.mxu0 0.0
        %1574 = vmatpush1.msra.mxu0 0.0
        %1575 = vmatprep.subr.mxu0 0.0
        %1576 = vmatpush1.msra.mxu0 0.0
        %1577 = vmatprep.subr.mxu0 0.0
        %1578 = vmatpush1.msra.mxu0 0.0
        %1579 = vmatprep.subr.mxu0 0.0
        %1580 = vmatpush1.msra.mxu0 0.0
        %1581 = vmatprep.subr.mxu0 0.0
        %1582 = vmatpush1.msra.mxu0 0.0
        %1583 = vmatprep.subr.mxu0 0.0
        %1584 = vmatpush1.msra.mxu0 0.0
        %1585 = vmatprep.subr.mxu0 0.0
        %1586 = vmatpush1.msra.mxu0 0.0
        %1587 = vmatprep.mubr.f32.mxu0 0.0
        %1588 = vmatmul.mubr.f32.gmra.mrb[0].mxu0 %v1521
        %v1589 = vpop.f32.mrb[0].mxu0
        %v1590 = vadd.f32 0.0, %v1589
        %v1591 = vpop.f32.mrb[0].mxu0
        %1592 = vdwg.mxu0
        %s1593 = scalar_lea.vmem %s382, 16
        %v1594 = vld [vmem:[%s1593] sm:$0xff]
        %v1595 = vld [vmem:[%s1593 + $0x8] sm:$0xff]
        %v1597 = vsel %vm681, %v1429, 0
        %v1600 = vsel %vm681, %v1590, 0
        %1602 = vmatprep.subr.mxu0 0.0
        %1603 = vmatpush1.msra.mxu0 %v1594
        %1604 = vmatprep.subr.mxu0 0.0
        %1605 = vmatpush1.msra.mxu0 %v1595
        %1606 = vmatprep.subr.mxu0 0.0
        %1607 = vmatpush1.msra.mxu0 0.0
        %1608 = vmatprep.subr.mxu0 0.0
        %1609 = vmatpush1.msra.mxu0 0.0
        %1610 = vmatprep.subr.mxu0 0.0
        %1611 = vmatpush1.msra.mxu0 0.0
        %1612 = vmatprep.subr.mxu0 0.0
        %1613 = vmatpush1.msra.mxu0 0.0
        %1614 = vmatprep.subr.mxu0 0.0
        %1615 = vmatpush1.msra.mxu0 0.0
        %1616 = vmatprep.subr.mxu0 0.0
        %1617 = vmatpush1.msra.mxu0 0.0
        %1618 = vmatprep.subr.mxu0 0.0
        %1619 = vmatpush1.msra.mxu0 0.0
        %1620 = vmatprep.subr.mxu0 0.0
        %1621 = vmatpush1.msra.mxu0 0.0
        %1622 = vmatprep.subr.mxu0 0.0
        %1623 = vmatpush1.msra.mxu0 0.0
        %1624 = vmatprep.subr.mxu0 0.0
        %1625 = vmatpush1.msra.mxu0 0.0
        %1626 = vmatprep.subr.mxu0 0.0
        %1627 = vmatpush1.msra.mxu0 0.0
        %1628 = vmatprep.subr.mxu0 0.0
        %1629 = vmatpush1.msra.mxu0 0.0
        %1630 = vmatprep.subr.mxu0 0.0
        %1631 = vmatpush1.msra.mxu0 0.0
        %1632 = vmatprep.subr.mxu0 0.0
        %1633 = vmatpush1.msra.mxu0 0.0
        %1634 = vmatprep.subr.mxu0 0.0
        %1635 = vmatpush1.msra.mxu0 0.0
        %1636 = vmatprep.subr.mxu0 0.0
        %1637 = vmatpush1.msra.mxu0 0.0
        %1638 = vmatprep.subr.mxu0 0.0
        %1639 = vmatpush1.msra.mxu0 0.0
        %1640 = vmatprep.subr.mxu0 0.0
        %1641 = vmatpush1.msra.mxu0 0.0
        %1642 = vmatprep.subr.mxu0 0.0
        %1643 = vmatpush1.msra.mxu0 0.0
        %1644 = vmatprep.subr.mxu0 0.0
        %1645 = vmatpush1.msra.mxu0 0.0
        %1646 = vmatprep.subr.mxu0 0.0
        %1647 = vmatpush1.msra.mxu0 0.0
        %1648 = vmatprep.subr.mxu0 0.0
        %1649 = vmatpush1.msra.mxu0 0.0
        %1650 = vmatprep.subr.mxu0 0.0
        %1651 = vmatpush1.msra.mxu0 0.0
        %1652 = vmatprep.subr.mxu0 0.0
        %1653 = vmatpush1.msra.mxu0 0.0
        %1654 = vmatprep.subr.mxu0 0.0
        %1655 = vmatpush1.msra.mxu0 0.0
        %1656 = vmatprep.subr.mxu0 0.0
        %1657 = vmatpush1.msra.mxu0 0.0
        %1658 = vmatprep.subr.mxu0 0.0
        %1659 = vmatpush1.msra.mxu0 0.0
        %1660 = vmatprep.subr.mxu0 0.0
        %1661 = vmatpush1.msra.mxu0 0.0
        %1662 = vmatprep.subr.mxu0 0.0
        %1663 = vmatpush1.msra.mxu0 0.0
        %1664 = vmatprep.subr.mxu0 0.0
        %1665 = vmatpush1.msra.mxu0 0.0
        %1666 = vmatprep.mubr.f32.mxu0 0.0
        %1667 = vmatmul.mubr.f32.gmra.mrb[0].mxu0 %v1597
        %v1668 = vpop.f32.mrb[0].mxu0
        %v1669 = vadd.f32 0.0, %v1668
        %v1670 = vpop.f32.mrb[0].mxu0
        %1671 = vmatprep.mubr.f32.mxu0 0.0
        %1672 = vmatmul.mubr.f32.gmra.mrb[0].mxu0 %v1600
        %v1673 = vpop.f32.mrb[0].mxu0
        %v1674 = vadd.f32 0.0, %v1673
        %v1675 = vpop.f32.mrb[0].mxu0
        %1676 = vdwg.mxu0
        %v1678 = vsel %vm681, %v841, 0
        %v1681 = vsel %vm681, %v1002, 0
        %1683 = vmatprep.subr.mxu0 0.0
        %1684 = vmatpush1.msra.mxu0 %v1005
        %1685 = vmatprep.subr.mxu0 0.0
        %1686 = vmatpush1.msra.mxu0 %v1006
        %1687 = vmatprep.subr.mxu0 0.0
        %1688 = vmatpush1.msra.mxu0 0.0
        %1689 = vmatprep.subr.mxu0 0.0
        %1690 = vmatpush1.msra.mxu0 0.0
        %1691 = vmatprep.subr.mxu0 0.0
        %1692 = vmatpush1.msra.mxu0 0.0
        %1693 = vmatprep.subr.mxu0 0.0
        %1694 = vmatpush1.msra.mxu0 0.0
        %1695 = vmatprep.subr.mxu0 0.0
        %1696 = vmatpush1.msra.mxu0 0.0
        %1697 = vmatprep.subr.mxu0 0.0
        %1698 = vmatpush1.msra.mxu0 0.0
        %1699 = vmatprep.subr.mxu0 0.0
        %1700 = vmatpush1.msra.mxu0 0.0
        %1701 = vmatprep.subr.mxu0 0.0
        %1702 = vmatpush1.msra.mxu0 0.0
        %1703 = vmatprep.subr.mxu0 0.0
        %1704 = vmatpush1.msra.mxu0 0.0
        %1705 = vmatprep.subr.mxu0 0.0
        %1706 = vmatpush1.msra.mxu0 0.0
        %1707 = vmatprep.subr.mxu0 0.0
        %1708 = vmatpush1.msra.mxu0 0.0
        %1709 = vmatprep.subr.mxu0 0.0
        %1710 = vmatpush1.msra.mxu0 0.0
        %1711 = vmatprep.subr.mxu0 0.0
        %1712 = vmatpush1.msra.mxu0 0.0
        %1713 = vmatprep.subr.mxu0 0.0
        %1714 = vmatpush1.msra.mxu0 0.0
        %1715 = vmatprep.subr.mxu0 0.0
        %1716 = vmatpush1.msra.mxu0 0.0
        %1717 = vmatprep.subr.mxu0 0.0
        %1718 = vmatpush1.msra.mxu0 0.0
        %1719 = vmatprep.subr.mxu0 0.0
        %1720 = vmatpush1.msra.mxu0 0.0
        %1721 = vmatprep.subr.mxu0 0.0
        %1722 = vmatpush1.msra.mxu0 0.0
        %1723 = vmatprep.subr.mxu0 0.0
        %1724 = vmatpush1.msra.mxu0 0.0
        %1725 = vmatprep.subr.mxu0 0.0
        %1726 = vmatpush1.msra.mxu0 0.0
        %1727 = vmatprep.subr.mxu0 0.0
        %1728 = vmatpush1.msra.mxu0 0.0
        %1729 = vmatprep.subr.mxu0 0.0
        %1730 = vmatpush1.msra.mxu0 0.0
        %1731 = vmatprep.subr.mxu0 0.0
        %1732 = vmatpush1.msra.mxu0 0.0
        %1733 = vmatprep.subr.mxu0 0.0
        %1734 = vmatpush1.msra.mxu0 0.0
        %1735 = vmatprep.subr.mxu0 0.0
        %1736 = vmatpush1.msra.mxu0 0.0
        %1737 = vmatprep.subr.mxu0 0.0
        %1738 = vmatpush1.msra.mxu0 0.0
        %1739 = vmatprep.subr.mxu0 0.0
        %1740 = vmatpush1.msra.mxu0 0.0
        %1741 = vmatprep.subr.mxu0 0.0
        %1742 = vmatpush1.msra.mxu0 0.0
        %1743 = vmatprep.subr.mxu0 0.0
        %1744 = vmatpush1.msra.mxu0 0.0
        %1745 = vmatprep.subr.mxu0 0.0
        %1746 = vmatpush1.msra.mxu0 0.0
        %1747 = vmatprep.mubr.f32.mxu0 0.0
        %1748 = vmatmul.mubr.f32.gmra.mrb[0].mxu0 %v1678
        %v1749 = vpop.f32.mrb[0].mxu0
        %v1750 = vadd.f32 %v1669, %v1749
        %v1751 = vpop.f32.mrb[0].mxu0
        %1752 = vmatprep.mubr.f32.mxu0 0.0
        %1753 = vmatmul.mubr.f32.gmra.mrb[0].mxu0 %v1681
        %v1754 = vpop.f32.mrb[0].mxu0
        %v1755 = vadd.f32 %v1674, %v1754
        %v1756 = vpop.f32.mrb[0].mxu0
        %1757 = vdwg.mxu0
        %v1758 = vlaneseq
        %v1759 = vshrl.u32 %v1758, 7
        %v1760 = vsub.s32 0, %v1759
        %v1761 = vrot.slane %v411, %v1760
        %v1762 = vadd.f32 %v1750, %v1761
        %v1763 = vadd.f32 %v1755, %v1761
        %v1764 = vadd.f32 %v1762, %v409
        %v1765 = vadd.f32 %v1763, %v410
        %v1766 = vsel %vm423, %v1764, 0.0
        %1767 = vadd.xlane.f32.xlu0 %v1766
        %v1768 = vpop.xlane.xlu0 %1767
        %v1769 = vsel %vm423, %v1765, 0.0
        %1770 = vadd.xlane.f32.xlu0 %v1769
        %v1771 = vpop.xlane.xlu0 %1770
        %v1772 = vrcp.pop 32.0
        %v1773 = vmul.f32 %v1768, %v1772
        %v1774 = vmul.f32 %v1771, %v1772
        %v1775 = vsub.f32 %v1764, %v1773
        %v1776 = vsub.f32 %v1765, %v1774
        %v1777 = vmul.f32 %v1775, %v1775
        %v1778 = vmul.f32 %v1776, %v1776
        %v1779 = vsel %vm423, %v1777, 0.0
        %1780 = vadd.xlane.f32.xlu0 %v1779
        %v1781 = vpop.xlane.xlu0 %1780
        %v1782 = vsel %vm423, %v1778, 0.0
        %1783 = vadd.xlane.f32.xlu0 %v1782
        %v1784 = vpop.xlane.xlu0 %1783
        %v1785 = vmul.f32 %v1781, %v1772
        %v1786 = vmul.f32 %v1784, %v1772
        %v1787 = vadd.f32 %v1785, 1e-12
        %v1788 = vadd.f32 %v1786, 1e-12
        %v1789 = vrsqrt.pop %v1787
        %v1790 = vrsqrt.pop %v1788
        %v1791 = vmul.f32 %v1775, %v1789
        %v1792 = vmul.f32 %v1776, %v1790
        %v1793 = vlaneseq
        %v1794 = vshrl.u32 %v1793, 7
        %v1795 = vsub.s32 1, %v1794
        %v1796 = vrot.slane %v411, %v1795
        %v1797 = vmul.f32 %v1791, %v1796
        %v1798 = vmul.f32 %v1792, %v1796
        %v1799 = vlaneseq
        %v1800 = vshrl.u32 %v1799, 7
        %v1801 = vsub.s32 2, %v1800
        %v1802 = vrot.slane %v411, %v1801
        %v1803 = vadd.f32 %v1797, %v1802
        %v1804 = vadd.f32 %v1798, %v1802
        %v1805 = vld [vmem:[%s387] sm:$0xff]
        %v1806 = vld [vmem:[%s387 + $0x8] sm:$0xff]
        %v1807 = vld [vmem:[%s387 + $0x10] sm:$0xff]
        %v1808 = vld [vmem:[%s387 + $0x18] sm:$0xff]
        %v1809 = vld [vmem:[%s390] sm:$0x1]
        %v1811 = vlaneseq
        %v1812 = vshrl.u32 %v1811, 7
        %v1813 = vsub.s32 0, %v1812
        %v1814 = vrot.slane %v1809, %v1813
        %v1817 = vsel %vm423, %v1803, 0
        %v1820 = vsel %vm423, %v1804, 0
        %1822 = vmatprep.subr.mxu0 0.0
        %1823 = vmatpush1.msra.mxu0 %v1805
        %1824 = vmatprep.subr.mxu0 0.0
        %1825 = vmatpush1.msra.mxu0 %v1806
        %1826 = vmatprep.subr.mxu0 0.0
        %1827 = vmatpush1.msra.mxu0 %v1807
        %1828 = vmatprep.subr.mxu0 0.0
        %1829 = vmatpush1.msra.mxu0 %v1808
        %1830 = vmatprep.subr.mxu0 0.0
        %1831 = vmatpush1.msra.mxu0 0.0
        %1832 = vmatprep.subr.mxu0 0.0
        %1833 = vmatpush1.msra.mxu0 0.0
        %1834 = vmatprep.subr.mxu0 0.0
        %1835 = vmatpush1.msra.mxu0 0.0
        %1836 = vmatprep.subr.mxu0 0.0
        %1837 = vmatpush1.msra.mxu0 0.0
        %1838 = vmatprep.subr.mxu0 0.0
        %1839 = vmatpush1.msra.mxu0 0.0
        %1840 = vmatprep.subr.mxu0 0.0
        %1841 = vmatpush1.msra.mxu0 0.0
        %1842 = vmatprep.subr.mxu0 0.0
        %1843 = vmatpush1.msra.mxu0 0.0
        %1844 = vmatprep.subr.mxu0 0.0
        %1845 = vmatpush1.msra.mxu0 0.0
        %1846 = vmatprep.subr.mxu0 0.0
        %1847 = vmatpush1.msra.mxu0 0.0
        %1848 = vmatprep.subr.mxu0 0.0
        %1849 = vmatpush1.msra.mxu0 0.0
        %1850 = vmatprep.subr.mxu0 0.0
        %1851 = vmatpush1.msra.mxu0 0.0
        %1852 = vmatprep.subr.mxu0 0.0
        %1853 = vmatpush1.msra.mxu0 0.0
        %1854 = vmatprep.subr.mxu0 0.0
        %1855 = vmatpush1.msra.mxu0 0.0
        %1856 = vmatprep.subr.mxu0 0.0
        %1857 = vmatpush1.msra.mxu0 0.0
        %1858 = vmatprep.subr.mxu0 0.0
        %1859 = vmatpush1.msra.mxu0 0.0
        %1860 = vmatprep.subr.mxu0 0.0
        %1861 = vmatpush1.msra.mxu0 0.0
        %1862 = vmatprep.subr.mxu0 0.0
        %1863 = vmatpush1.msra.mxu0 0.0
        %1864 = vmatprep.subr.mxu0 0.0
        %1865 = vmatpush1.msra.mxu0 0.0
        %1866 = vmatprep.subr.mxu0 0.0
        %1867 = vmatpush1.msra.mxu0 0.0
        %1868 = vmatprep.subr.mxu0 0.0
        %1869 = vmatpush1.msra.mxu0 0.0
        %1870 = vmatprep.subr.mxu0 0.0
        %1871 = vmatpush1.msra.mxu0 0.0
        %1872 = vmatprep.subr.mxu0 0.0
        %1873 = vmatpush1.msra.mxu0 0.0
        %1874 = vmatprep.subr.mxu0 0.0
        %1875 = vmatpush1.msra.mxu0 0.0
        %1876 = vmatprep.subr.mxu0 0.0
        %1877 = vmatpush1.msra.mxu0 0.0
        %1878 = vmatprep.subr.mxu0 0.0
        %1879 = vmatpush1.msra.mxu0 0.0
        %1880 = vmatprep.subr.mxu0 0.0
        %1881 = vmatpush1.msra.mxu0 0.0
        %1882 = vmatprep.subr.mxu0 0.0
        %1883 = vmatpush1.msra.mxu0 0.0
        %1884 = vmatprep.subr.mxu0 0.0
        %1885 = vmatpush1.msra.mxu0 0.0
        %1886 = vmatprep.mubr.f32.mxu0 0.0
        %1887 = vmatmul.mubr.f32.gmra.mrb[0].mxu0 %v1817
        %v1888 = vpop.f32.mrb[0].mxu0
        %v1889 = vadd.f32 %v1814, %v1888
        %v1890 = vpop.f32.mrb[0].mxu0
        %1891 = vmatprep.mubr.f32.mxu0 0.0
        %1892 = vmatmul.mubr.f32.gmra.mrb[0].mxu0 %v1820
        %v1893 = vpop.f32.mrb[0].mxu0
        %v1894 = vadd.f32 %v1814, %v1893
        %v1895 = vpop.f32.mrb[0].mxu0
        %1896 = vdwg.mxu0
        %v1897 = vmul.f32 %v1889, 0.5
        %v1898 = vmul.f32 %v1894, 0.5
        %v1899 = vmul.f32 %v1889, 0.044715
        %v1900 = vmul.f32 %v1894, 0.044715
        %v1901 = vmul.f32 %v1899, %v1889
        %v1902 = vmul.f32 %v1900, %v1894
        %v1903 = vmul.f32 %v1901, %v1889
        %v1904 = vmul.f32 %v1902, %v1894
        %v1905 = vadd.f32 %v1889, %v1903
        %v1906 = vadd.f32 %v1894, %v1904
        %v1907 = vmul.f32 %v1905, 0.7978846
        %v1908 = vmul.f32 %v1906, 0.7978846
        %v1909 = vtanh.pop %v1907
        %v1910 = vtanh.pop %v1908
        %v1911 = vadd.f32 %v1909, 1.0
        %v1912 = vadd.f32 %v1910, 1.0
        %v1913 = vmul.f32 %v1897, %v1911
        %v1914 = vmul.f32 %v1898, %v1912
        %v1915 = vld [vmem:[%s395] sm:$0xff]
        %v1916 = vld [vmem:[%s395 + $0x8] sm:$0xff]
        %v1917 = vld [vmem:[%s395 + $0x10] sm:$0xff]
        %v1918 = vld [vmem:[%s395 + $0x18] sm:$0xff]
        %v1919 = vld [vmem:[%s395 + $0x20] sm:$0xff]
        %v1920 = vld [vmem:[%s395 + $0x28] sm:$0xff]
        %v1921 = vld [vmem:[%s395 + $0x30] sm:$0xff]
        %v1922 = vld [vmem:[%s395 + $0x38] sm:$0xff]
        %v1923 = vlaneseq
        %v1924 = vshrl.u32 %v1923, 7
        %v1925 = vsub.s32 3, %v1924
        %v1926 = vrot.slane %v411, %v1925
        %vm1927 = vcmask 523264
        %v1929 = vsel %vm1927, %v1913, 0
        %v1932 = vsel %vm1927, %v1914, 0
        %1934 = vmatprep.subr.mxu0 0.0
        %1935 = vmatpush1.msra.mxu0 %v1915
        %1936 = vmatprep.subr.mxu0 0.0
        %1937 = vmatpush1.msra.mxu0 %v1916
        %1938 = vmatprep.subr.mxu0 0.0
        %1939 = vmatpush1.msra.mxu0 %v1917
        %1940 = vmatprep.subr.mxu0 0.0
        %1941 = vmatpush1.msra.mxu0 %v1918
        %1942 = vmatprep.subr.mxu0 0.0
        %1943 = vmatpush1.msra.mxu0 %v1919
        %1944 = vmatprep.subr.mxu0 0.0
        %1945 = vmatpush1.msra.mxu0 %v1920
        %1946 = vmatprep.subr.mxu0 0.0
        %1947 = vmatpush1.msra.mxu0 %v1921
        %1948 = vmatprep.subr.mxu0 0.0
        %1949 = vmatpush1.msra.mxu0 %v1922
        %1950 = vmatprep.subr.mxu0 0.0
        %1951 = vmatpush1.msra.mxu0 0.0
        %1952 = vmatprep.subr.mxu0 0.0
        %1953 = vmatpush1.msra.mxu0 0.0
        %1954 = vmatprep.subr.mxu0 0.0
        %1955 = vmatpush1.msra.mxu0 0.0
        %1956 = vmatprep.subr.mxu0 0.0
        %1957 = vmatpush1.msra.mxu0 0.0
        %1958 = vmatprep.subr.mxu0 0.0
        %1959 = vmatpush1.msra.mxu0 0.0
        %1960 = vmatprep.subr.mxu0 0.0
        %1961 = vmatpush1.msra.mxu0 0.0
        %1962 = vmatprep.subr.mxu0 0.0
        %1963 = vmatpush1.msra.mxu0 0.0
        %1964 = vmatprep.subr.mxu0 0.0
        %1965 = vmatpush1.msra.mxu0 0.0
        %1966 = vmatprep.subr.mxu0 0.0
        %1967 = vmatpush1.msra.mxu0 0.0
        %1968 = vmatprep.subr.mxu0 0.0
        %1969 = vmatpush1.msra.mxu0 0.0
        %1970 = vmatprep.subr.mxu0 0.0
        %1971 = vmatpush1.msra.mxu0 0.0
        %1972 = vmatprep.subr.mxu0 0.0
        %1973 = vmatpush1.msra.mxu0 0.0
        %1974 = vmatprep.subr.mxu0 0.0
        %1975 = vmatpush1.msra.mxu0 0.0
        %1976 = vmatprep.subr.mxu0 0.0
        %1977 = vmatpush1.msra.mxu0 0.0
        %1978 = vmatprep.subr.mxu0 0.0
        %1979 = vmatpush1.msra.mxu0 0.0
        %1980 = vmatprep.subr.mxu0 0.0
        %1981 = vmatpush1.msra.mxu0 0.0
        %1982 = vmatprep.subr.mxu0 0.0
        %1983 = vmatpush1.msra.mxu0 0.0
        %1984 = vmatprep.subr.mxu0 0.0
        %1985 = vmatpush1.msra.mxu0 0.0
        %1986 = vmatprep.subr.mxu0 0.0
        %1987 = vmatpush1.msra.mxu0 0.0
        %1988 = vmatprep.subr.mxu0 0.0
        %1989 = vmatpush1.msra.mxu0 0.0
        %1990 = vmatprep.subr.mxu0 0.0
        %1991 = vmatpush1.msra.mxu0 0.0
        %1992 = vmatprep.subr.mxu0 0.0
        %1993 = vmatpush1.msra.mxu0 0.0
        %1994 = vmatprep.subr.mxu0 0.0
        %1995 = vmatpush1.msra.mxu0 0.0
        %1996 = vmatprep.subr.mxu0 0.0
        %1997 = vmatpush1.msra.mxu0 0.0
        %1998 = vmatprep.mubr.f32.mxu0 0.0
        %1999 = vmatmul.mubr.f32.gmra.mrb[0].mxu0 %v1929
        %v2000 = vpop.f32.mrb[0].mxu0
        %v2001 = vadd.f32 %v1926, %v2000
        %v2002 = vpop.f32.mrb[0].mxu0
        %2003 = vmatprep.mubr.f32.mxu0 0.0
        %2004 = vmatmul.mubr.f32.gmra.mrb[0].mxu0 %v1932
        %v2005 = vpop.f32.mrb[0].mxu0
        %v2006 = vadd.f32 %v1926, %v2005
        %v2007 = vpop.f32.mrb[0].mxu0
        %2008 = vdwg.mxu0
        %v2009 = vadd.f32 %v2001, %v1803
        %v2010 = vadd.f32 %v2006, %v1804
        %v2011 = vsel %vm423, %v2009, 0.0
        %2012 = vadd.xlane.f32.xlu0 %v2011
        %v2013 = vpop.xlane.xlu0 %2012
        %v2014 = vsel %vm423, %v2010, 0.0
        %2015 = vadd.xlane.f32.xlu0 %v2014
        %v2016 = vpop.xlane.xlu0 %2015
        %v2017 = vmul.f32 %v2013, %v1772
        %v2018 = vmul.f32 %v2016, %v1772
        %v2019 = vsub.f32 %v2009, %v2017
        %v2020 = vsub.f32 %v2010, %v2018
        %v2021 = vmul.f32 %v2019, %v2019
        %v2022 = vmul.f32 %v2020, %v2020
        %v2023 = vsel %vm423, %v2021, 0.0
        %2024 = vadd.xlane.f32.xlu0 %v2023
        %v2025 = vpop.xlane.xlu0 %2024
        %v2026 = vsel %vm423, %v2022, 0.0
        %2027 = vadd.xlane.f32.xlu0 %v2026
        %v2028 = vpop.xlane.xlu0 %2027
        %v2029 = vmul.f32 %v2025, %v1772
        %v2030 = vmul.f32 %v2028, %v1772
        %v2031 = vadd.f32 %v2029, 1e-12
        %v2032 = vadd.f32 %v2030, 1e-12
        %v2033 = vrsqrt.pop %v2031
        %v2034 = vrsqrt.pop %v2032
        %v2035 = vmul.f32 %v2019, %v2033
        %v2036 = vmul.f32 %v2020, %v2034
        %v2037 = vlaneseq
        %v2038 = vshrl.u32 %v2037, 7
        %v2039 = vsub.s32 4, %v2038
        %v2040 = vrot.slane %v411, %v2039
        %v2041 = vmul.f32 %v2035, %v2040
        %v2042 = vmul.f32 %v2036, %v2040
        %v2043 = vlaneseq
        %v2044 = vshrl.u32 %v2043, 7
        %v2045 = vsub.s32 5, %v2044
        %v2046 = vrot.slane %v411, %v2045
        %v2047 = vadd.f32 %v2041, %v2046
        %v2048 = vadd.f32 %v2042, %v2046
        %2049 = vst.msk [vmem:[#allocation2] sm:$0xff] %vm423, %v2047
        %2050 = vst.msk [vmem:[#allocation2 + $0x8] sm:$0xff] %vm423, %v2048
        // Predicated region
        $region57: #{tpu_custom_call.1} parent=51 // pred_check
          %p2051 = pneg %p236
        $region58: #{tpu_custom_call.1} parent=51 // pred_check_branch
          %2053 = sbr.rel (%p2051) target = $region60
        $region59: #{tpu_custom_call.1} parent=51 // pred_region
          %s2055 = ssub.s32 256, 256
          %2056 = vsyncadd [#allocation3], %s2055
          %s2057 = sshll.u32 [#allocation2], 4
          %s2058 = int_to_ptr.vmem [resolvable:$true] %s2057
          %2063 = dma.vmem_to_hbm [thread:$0]  %s2058, 256, %s8, [#allocation3], 128, 128, 8
        $region60: #{tpu_custom_call.1} parent=51 // pred_fallthru
          _
        // Predicated region
        $region61: #{tpu_custom_call.1} parent=51 // pred_check
          %p2064 = pneg %p236
        $region62: #{tpu_custom_call.1} parent=51 // pred_check_branch
          %2066 = sbr.rel (%p2064) target = $region64
        $region63: #{tpu_custom_call.1} parent=51 // pred_region
          %2067 = dma.done [#allocation3], 256
        $region64: #{tpu_custom_call.1} parent=51 // pred_fallthru
          _
      $region52: #{tpu_custom_call.1} parent=5 // pred_fallthru
        _
      %p2068 = scmp.le.s32.totalorder 2, %s15
      // Predicated region
      $region65: #{tpu_custom_call.1} parent=5 // pred_check
        %p2069 = pneg %p2068
      $region66: #{tpu_custom_call.1} parent=5 // pred_check_branch
        %2071 = sbr.rel (%p2069) target = $region68
      $region67: #{tpu_custom_call.1} parent=5 // pred_region
        %s2072 = ssub.s32 %s15, 2
      $region68: #{tpu_custom_call.1} parent=5 // pred_fallthru
        _
    $region6: #{tpu_custom_call.1} parent=1 // loop_footer
      %s19 = sadd.s32 1, %s15
    $region7: #{tpu_custom_call.1} parent=1 // loop_footer_branch
      %14 = sbr.rel target = $region3
    $region8: #{tpu_custom_call.1} parent=1 // loop_exit
      _
    %2073 = vsyncpa [#allocation3], 1
    %s2074 = scalar_lea.sflag [#allocation3], 1
    %2075 = vsyncpa %s2074, 1

</llo_original>
